<compile_context>
chip_gen: v6e
topology: v6e:2x2x1
jax: 0.10.0
libtpu: 0.0.40
codegen_flags: <defaults>
</compile_context>

<pallas_src>
import math
import functools

import jax
import jax.numpy as jnp
from jax import lax
from jax.experimental import pallas as pl
from jax.experimental.pallas import tpu as pltpu


def _pick_head_block(num_heads, head_dim):
    """Smallest head-group size whose output slab is lane-aligned (128)."""
    for hb in range(1, num_heads + 1):
        if num_heads % hb == 0 and (hb * head_dim) % 128 == 0:
            return hb
    return num_heads  # block width == all_head => single full-width dense store


def _vmem_capacity_bytes():
    try:
        cap = int(pltpu.get_tpu_info().vmem_capacity_bytes)
        if cap > 0:
            return cap
    except Exception:
        pass
    return 64 << 20  # conservative default (v7x per-TensorCore VMEM)


def _self_attn_kernel(x_ref, w_ref, b_ref, o_ref, *, head_dim, heads_per_block,
                      weights_resident, head_grid_axis, split_layout):
    # x_ref : (S, hidden)                      current batch row's activations
    # w_ref : resident -> (nh, hidden, 3*hd) or (nh, 3, hidden, hd)   [bf16]
    #         streamed -> (hb, hidden, 3*hd) or (hb, 3, hidden, hd)   [bf16]
    # b_ref : matching bias layout, f32
    # o_ref : (S, hb*hd) slab of the final [B, S, all_head] output
    # The 1/sqrt(head_dim) softmax scale is pre-folded into the Q weight/bias.
    hb = heads_per_block
    base = pl.program_id(head_grid_axis) * hb if weights_resident else 0

    x = x_ref[...].astype(jnp.bfloat16)                       # (S, hidden)

    ctxs = []
    for h in range(hb):
        idx = base + h
        if split_layout:
            w3 = w_ref[idx]                                   # (3, hidden, hd)
            b3 = b_ref[idx]                                   # (3, 1, hd)
            q = jnp.dot(x, w3[0], preferred_element_type=jnp.float32) + b3[0]
            k = jnp.dot(x, w3[1], preferred_element_type=jnp.float32) + b3[1]
            v = jnp.dot(x, w3[2], preferred_element_type=jnp.float32) + b3[2]
        else:
            w = w_ref[idx]                                    # (hidden, 3*hd)
            b = b_ref[idx]                                    # (1, 3*hd)
            qkv = jnp.dot(x, w, preferred_element_type=jnp.float32) + b
            q = qkv[:, :head_dim]                 # lane-aligned (hd % 128 == 0)
            k = qkv[:, head_dim:2 * head_dim]
            v = qkv[:, 2 * head_dim:]
        q = q.astype(jnp.bfloat16)
        k = k.astype(jnp.bfloat16)
        v = v.astype(jnp.bfloat16)

        # attention_scores = Q @ K^T (scale already folded into Q); contract
        # the last dims so K is consumed untransposed.
        # TODO(synk): at head_dim=128 this only half-fills the 256-wide
        # v6e/v7x MXU; consider pairing query tiles per weight push.
        s = lax.dot_general(q, k, dimension_numbers=(((1,), (1,)), ((), ())),
                            preferred_element_type=jnp.float32)   # (S, S) f32

        # Numerically stable softmax; approx reciprocal runs on the EUP slot.
        m = jnp.max(s, axis=-1, keepdims=True)
        e = jnp.exp(s - m)
        p = e * pl.reciprocal(jnp.sum(e, axis=-1, keepdims=True), approx=True)

        # TODO(synk): dropout on attention_probs omitted (eval-mode identity).

        ctxs.append(jnp.dot(p.astype(jnp.bfloat16), v,
                            preferred_element_type=jnp.float32))  # (S, hd)

    out = ctxs[0] if hb == 1 else jnp.concatenate(ctxs, axis=-1)  # (S, hb*hd)
    o_ref[...] = out.astype(o_ref.dtype)


def self_attention(hidden_states, params, *, num_attention_heads, hidden_size):
    """hidden_states: [B, S, hidden_size] float32.

    params (PyTorch nn.Linear convention):
      'wq','wk','wv': [all_head_size, hidden_size]
      'bq','bk','bv': [all_head_size]
    with all_head_size = hidden_size * num_attention_heads and
    attention_head_size = hidden_size (as in the reference module).
    """
    B, S, H = hidden_states.shape
    assert H == hidden_size
    nh = num_attention_heads
    head_dim = hidden_size                      # attention_head_size == hidden_size
    all_head = nh * head_dim
    scale = 1.0 / math.sqrt(float(head_dim))

    hb = _pick_head_block(nh, head_dim)
    n_groups = nh // hb
    split_layout = (head_dim % 128) != 0

    # ---- pack weights (scale folded into Q); bf16 at rest, bias stays f32 ----
    def head_w(w, s=1.0):   # [all_head, hidden] -> [nh, hidden, head_dim]
        return (w * s).T.reshape(hidden_size, nh, head_dim).transpose(1, 0, 2)

    def head_b(b, s=1.0):   # [all_head] -> [nh, head_dim]
        return (b * s).reshape(nh, head_dim)

    wq, wk, wv = head_w(params["wq"], scale), head_w(params["wk"]), head_w(params["wv"])
    bq, bk, bv = head_b(params["bq"], scale), head_b(params["bk"]), head_b(params["bv"])
    if split_layout:
        wqkv = jnp.stack([wq, wk, wv], axis=1).astype(jnp.bfloat16)        # [nh,3,hid,hd]
        bqkv = jnp.stack([bq, bk, bv], axis=1)[:, :, None, :]              # [nh,3,1,hd]
    else:
        wqkv = jnp.concatenate([wq, wk, wv], axis=-1).astype(jnp.bfloat16)  # [nh,hid,3hd]
        bqkv = jnp.concatenate([bq, bk, bv], axis=-1)[:, None, :]           # [nh,1,3hd]

    # ---- generation-aware VMEM budget -> weight residency + vmem limit ----
    cap = _vmem_capacity_bytes()
    budget = int(cap * 0.8)
    x_block = S * hidden_size * 4
    o_block = S * hb * head_dim * hidden_states.dtype.itemsize
    w_full = nh * hidden_size * 3 * head_dim * 2            # bf16
    w_group = hb * hidden_size * 3 * head_dim * 2
    b_full = nh * 3 * head_dim * 4
    b_group = hb * 3 * head_dim * 4
    # S x S scores (+exp, +bf16 probs), qkv/q/k/v copies, per-head contexts.
    interm = S * S * 12 + S * 3 * head_dim * 10 + 2 * hb * S * head_dim * 4
    fixed = 2 * x_block + 2 * o_block + interm
    # Conservative: count 2x weight buffering even though we request Buffered(1).
    weights_resident = fixed + 2 * (w_full + b_full) <= budget

    if weights_resident:
        need = fixed + 2 * (w_full + b_full)
        heads_outer = False
    else:
        need = fixed + 2 * (w_group + b_group)
        # If a head-group's weights outweigh the activation block, make batch the
        # inner grid axis so each group's weights are DMA'd once, not B times.
        heads_outer = w_group > x_block
    vmem_limit = int(min(cap - (2 << 20), max(need + (4 << 20), 32 << 20)))

    kernel = functools.partial(
        _self_attn_kernel, head_dim=head_dim, heads_per_block=hb,
        weights_resident=weights_resident,
        head_grid_axis=0 if heads_outer else 1, split_layout=split_layout)

    out_shape = jax.ShapeDtypeStruct((B, S, all_head), hidden_states.dtype)

    if split_layout:
        w_blk_res = (nh, 3, hidden_size, head_dim)
        w_blk_grp = (hb, 3, hidden_size, head_dim)
        b_blk_res = (nh, 3, 1, head_dim)
        b_blk_grp = (hb, 3, 1, head_dim)
        zeros = (0, 0, 0, 0)
    else:
        w_blk_res = (nh, hidden_size, 3 * head_dim)
        w_blk_grp = (hb, hidden_size, 3 * head_dim)
        b_blk_res = (nh, 1, 3 * head_dim)
        b_blk_grp = (hb, 1, 3 * head_dim)
        zeros = (0, 0, 0)

    def make_call(single_buffer_weights):
        if heads_outer:
            grid = (n_groups, B)
            x_map = lambda g, b: (b, 0, 0)
            o_map = lambda g, b: (b, 0, g)
            wg_map = lambda g, b: (g,) + zeros[1:]
        else:
            grid = (B, n_groups)
            x_map = lambda b, g: (b, 0, 0)
            o_map = lambda b, g: (b, 0, g)
            wg_map = lambda b, g: (g,) + zeros[1:]
        const_map = lambda *args: zeros

        x_spec = pl.BlockSpec((None, S, hidden_size), x_map)
        o_spec = pl.BlockSpec((None, S, hb * head_dim), o_map)
        if weights_resident:
            kwargs = {}
            if single_buffer_weights:
                # Constant index_map => double-buffering is pure VMEM waste.
                kwargs = dict(pipeline_mode=pl.Buffered(1))
            w_spec = pl.BlockSpec(w_blk_res, const_map, **kwargs)
            b_spec = pl.BlockSpec(b_blk_res, const_map, **kwargs)
        else:
            w_spec = pl.BlockSpec(w_blk_grp, wg_map)
            b_spec = pl.BlockSpec(b_blk_grp, wg_map)

        return pl.pallas_call(
            kernel,
            out_shape=out_shape,
            grid_spec=pltpu.PrefetchScalarGridSpec(
                num_scalar_prefetch=0,
                grid=grid,
                in_specs=[x_spec, w_spec, b_spec],
                out_specs=o_spec,
            ),
            compiler_params=pltpu.CompilerParams(
                dimension_semantics=("parallel", "parallel"),
                vmem_limit_bytes=vmem_limit),
        )

    if weights_resident and hasattr(pl, "Buffered"):
        try:
            return make_call(True)(hidden_states, wqkv, bqkv)
        except Exception:
            pass  # jax build rejected Buffered(1); use default double-buffering.
    return make_call(False)(hidden_states, wqkv, bqkv)


def _reference(hidden_states, params, *, num_attention_heads, hidden_size):
    """Pure-JAX f32 reference mirroring the PyTorch forward (eval mode)."""
    B, S, _ = hidden_states.shape
    nh = num_attention_heads
    head_dim = hidden_size

    def lin(w, b):
        return hidden_states @ w.T + b          # [B, S, all_head]

    def t4s(x):  # transpose_for_scores_1
        return x.reshape(B, S, nh, head_dim).transpose(0, 2, 1, 3)

    q = t4s(lin(params["wq"], params["bq"]))
    k = t4s(lin(params["wk"], params["bk"]))
    v = t4s(lin(params["wv"], params["bv"]))
    s = jnp.einsum("bhqd,bhkd->bhqk", q, k) / math.sqrt(float(head_dim))
    p = jax.nn.softmax(s, axis=-1)
    ctx = jnp.einsum("bhqk,bhkd->bhqd", p, v)
    return ctx.transpose(0, 2, 1, 3).reshape(B, S, nh * head_dim)


if __name__ == "__main__":
    def run_case(B, S, hidden_size, num_heads, key):
        all_head = hidden_size * num_heads
        kx, kwq, kwk, kwv, kbq, kbk, kbv = jax.random.split(key, 7)
        x = jax.random.normal(kx, (B, S, hidden_size), dtype=jnp.float32)
        bound = 1.0 / math.sqrt(hidden_size)
        params = {
            "wq": jax.random.uniform(kwq, (all_head, hidden_size), jnp.float32, -bound, bound),
            "wk": jax.random.uniform(kwk, (all_head, hidden_size), jnp.float32, -bound, bound),
            "wv": jax.random.uniform(kwv, (all_head, hidden_size), jnp.float32, -bound, bound),
            "bq": jax.random.uniform(kbq, (all_head,), jnp.float32, -bound, bound),
            "bk": jax.random.uniform(kbk, (all_head,), jnp.float32, -bound, bound),
            "bv": jax.random.uniform(kbv, (all_head,), jnp.float32, -bound, bound),
        }
        out = self_attention(x, params,
                             num_attention_heads=num_heads,
                             hidden_size=hidden_size)
        out = jax.block_until_ready(out)
        ref = _reference(x, params,
                         num_attention_heads=num_heads,
                         hidden_size=hidden_size)
        assert out.shape == (B, S, all_head), out.shape
        # Tolerance covers bf16 MXU operands (f32 accumulation) and the EUP
        # approximate reciprocal in the softmax denominator.
        assert jnp.allclose(out, ref, atol=3e-2, rtol=3e-2), \
            float(jnp.max(jnp.abs(out - ref)))

    key = jax.random.PRNGKey(0)
    k1, k2 = jax.random.split(key)
    # Lane-aligned fused-QKV path (head_dim multiple of 128, one head per step).
    run_case(B=2, S=8, hidden_size=128, num_heads=2, key=k1)
    # Small-head_dim path: split weight layout + head-group (4*32 = 128 lanes)
    # so the output store is still a dense 128-lane slab.
    run_case(B=2, S=8, hidden_size=32, num_heads=4, key=k2)
    print("KERNEL_OK")
</pallas_src>

<mosaic_0001>
module attributes {stable_mosaic.version = 11 : i64} {
  func.func @_self_attn_kernel(%arg0: i32, %arg1: i32, %arg2: memref<1x8x128xf32, #tpu.memory_space<vmem>>, %arg3: memref<2x128x384xbf16, #tpu.memory_space<vmem>>, %arg4: memref<2x1x384xf32, #tpu.memory_space<vmem>>, %arg5: memref<1x8x128xf32, #tpu.memory_space<vmem>>) attributes {dimension_semantics = [#tpu.dimension_semantics<parallel>, #tpu.dimension_semantics<parallel>], iteration_bounds = array<i64: 2, 2>, scalar_prefetch = 0 : i64, scratch_operands = 0 : i64, tpu.core_type = #tpu.core_type<tc>, window_params = [{transform_indices = @transform_0, window_bounds = array<i64: 1, 8, 128>}, {pipeline_mode = #tpu.pipeline_mode<synchronous>, transform_indices = @transform_1, window_bounds = array<i64: 2, 128, 384>}, {pipeline_mode = #tpu.pipeline_mode<synchronous>, transform_indices = @transform_2, window_bounds = array<i64: 2, 1, 384>}, {transform_indices = @transform_3, window_bounds = array<i64: 1, 8, 128>}]} {
    %c1_i32 = arith.constant 1 : i32
    %0 = arith.muli %arg1, %c1_i32 : i32
    %c0 = arith.constant 0 : index
    %c0_0 = arith.constant 0 : index
    %c0_1 = arith.constant 0 : index
    %1 = vector.load %arg2[%c0, %c0_0, %c0_1] : memref<1x8x128xf32, #tpu.memory_space<vmem>>, vector<1x8x128xf32>
    %2 = vector.shape_cast %1 : vector<1x8x128xf32> to vector<8x128xf32>
    %3 = arith.truncf %2 : vector<8x128xf32> to vector<8x128xbf16>
    %c0_i32 = arith.constant 0 : i32
    %4 = arith.addi %0, %c0_i32 : i32
    %5 = arith.index_cast %4 : i32 to index
    %c0_2 = arith.constant 0 : index
    %c0_3 = arith.constant 0 : index
    %6 = vector.load %arg3[%5, %c0_2, %c0_3] : memref<2x128x384xbf16, #tpu.memory_space<vmem>>, vector<1x128x384xbf16>
    %7 = vector.shape_cast %6 : vector<1x128x384xbf16> to vector<128x384xbf16>
    %8 = arith.index_cast %4 : i32 to index
    %c0_4 = arith.constant 0 : index
    %c0_5 = arith.constant 0 : index
    %9 = vector.load %arg4[%8, %c0_4, %c0_5] : memref<2x1x384xf32, #tpu.memory_space<vmem>>, vector<1x1x384xf32>
    %10 = vector.shape_cast %9 : vector<1x1x384xf32> to vector<1x384xf32>
    %cst = arith.constant dense<0.000000e+00> : vector<8x384xf32>
    %11 = tpu.matmul %3, %7, %cst {dimension_numbers = #tpu.dot_dimension_numbers<[1], [0], [0], [1], [0, 0, 1, 1], [], []>} : vector<8x128xbf16>, vector<128x384xbf16>, vector<8x384xf32> -> vector<8x384xf32>
    %12 = vector.broadcast %10 : vector<1x384xf32> to vector<8x384xf32>
    %13 = arith.addf %11, %12 : vector<8x384xf32>
    %14 = vector.extract_strided_slice %13 {offsets = [0, 0], sizes = [8, 128], strides = [1, 1]} : vector<8x384xf32> to vector<8x128xf32>
    %15 = vector.extract_strided_slice %13 {offsets = [0, 128], sizes = [8, 128], strides = [1, 1]} : vector<8x384xf32> to vector<8x128xf32>
    %16 = vector.extract_strided_slice %13 {offsets = [0, 256], sizes = [8, 128], strides = [1, 1]} : vector<8x384xf32> to vector<8x128xf32>
    %17 = arith.truncf %14 : vector<8x128xf32> to vector<8x128xbf16>
    %18 = arith.truncf %15 : vector<8x128xf32> to vector<8x128xbf16>
    %19 = arith.truncf %16 : vector<8x128xf32> to vector<8x128xbf16>
    %cst_6 = arith.constant dense<0.000000e+00> : vector<8x8xf32>
    %20 = tpu.matmul %17, %18, %cst_6 {dimension_numbers = #tpu.dot_dimension_numbers<[1], [1], [0], [0], [0, 0, 1, 0], [], []>} : vector<8x128xbf16>, vector<8x128xbf16>, vector<8x8xf32> -> vector<8x8xf32>
    %cst_7 = arith.constant dense<0xFF800000> : vector<8xf32>
    %21 = vector.multi_reduction <maximumf>, %20, %cst_7 [1] : vector<8x8xf32> to vector<8xf32>
    %22 = vector.shape_cast %21 : vector<8xf32> to vector<8x1xf32>
    %23 = vector.broadcast %22 : vector<8x1xf32> to vector<8x8xf32>
    %24 = arith.subf %20, %23 : vector<8x8xf32>
    %25 = math.exp %24 : vector<8x8xf32>
    %cst_8 = arith.constant dense<0.000000e+00> : vector<8xf32>
    %26 = vector.multi_reduction <add>, %25, %cst_8 [1] : vector<8x8xf32> to vector<8xf32>
    %27 = vector.shape_cast %26 : vector<8xf32> to vector<8x1xf32>
    %28 = tpu.reciprocal %27 {approx = true} : vector<8x1xf32> -> vector<8x1xf32>
    %29 = vector.broadcast %28 : vector<8x1xf32> to vector<8x8xf32>
    %30 = arith.mulf %25, %29 : vector<8x8xf32>
    %31 = arith.truncf %30 : vector<8x8xf32> to vector<8x8xbf16>
    %cst_9 = arith.constant dense<0.000000e+00> : vector<8x128xf32>
    %32 = tpu.matmul %31, %19, %cst_9 {dimension_numbers = #tpu.dot_dimension_numbers<[1], [0], [0], [1], [0, 0, 1, 1], [], []>} : vector<8x8xbf16>, vector<8x128xbf16>, vector<8x128xf32> -> vector<8x128xf32>
    %c0_10 = arith.constant 0 : index
    %c0_11 = arith.constant 0 : index
    %c0_12 = arith.constant 0 : index
    %33 = vector.load %arg5[%c0_10, %c0_11, %c0_12] : memref<1x8x128xf32, #tpu.memory_space<vmem>>, vector<1x8x128xf32>
    %34 = vector.shape_cast %33 : vector<1x8x128xf32> to vector<8x128xf32>
    %35 = vector.shape_cast %32 : vector<8x128xf32> to vector<1x8x128xf32>
    tpu.vector_store %arg5[%c0_10, %c0_11, %c0_12], %35 {strides = array<i32>} : memref<1x8x128xf32, #tpu.memory_space<vmem>>, vector<1x8x128xf32>,
    return
  }
  func.func @transform_0(%arg0: i32, %arg1: i32) -> (i32, i32, i32) {
    %c0_i32 = arith.constant 0 : i32
    %c0_i32_0 = arith.constant 0 : i32
    %c0_i32_1 = arith.constant 0 : i32
    return %arg0, %c0_i32, %c0_i32_0 : i32, i32, i32
  }
  func.func @transform_1(%arg0: i32, %arg1: i32) -> (i32, i32, i32) {
    %c0_i32 = arith.constant 0 : i32
    %c0_i32_0 = arith.constant 0 : i32
    %c0_i32_1 = arith.constant 0 : i32
    %c0_i32_2 = arith.constant 0 : i32
    return %c0_i32, %c0_i32_0, %c0_i32_1 : i32, i32, i32
  }
  func.func @transform_2(%arg0: i32, %arg1: i32) -> (i32, i32, i32) {
    %c0_i32 = arith.constant 0 : i32
    %c0_i32_0 = arith.constant 0 : i32
    %c0_i32_1 = arith.constant 0 : i32
    %c0_i32_2 = arith.constant 0 : i32
    return %c0_i32, %c0_i32_0, %c0_i32_1 : i32, i32, i32
  }
  func.func @transform_3(%arg0: i32, %arg1: i32) -> (i32, i32, i32) {
    %c0_i32 = arith.constant 0 : i32
    %c0_i32_0 = arith.constant 0 : i32
    return %arg0, %c0_i32, %arg1 : i32, i32, i32
  }
}

module attributes {stable_mosaic.version = 11 : i64} {
  func.func @_self_attn_kernel(%arg0: i32, %arg1: i32, %arg2: memref<1x8x128xf32, #tpu.memory_space<vmem>>, %arg3: memref<2x128x384xbf16, #tpu.memory_space<vmem>>, %arg4: memref<2x1x384xf32, #tpu.memory_space<vmem>>, %arg5: memref<1x8x128xf32, #tpu.memory_space<vmem>>) attributes {dimension_semantics = [#tpu.dimension_semantics<parallel>, #tpu.dimension_semantics<parallel>], iteration_bounds = array<i64: 2, 2>, scalar_prefetch = 0 : i64, scratch_operands = 0 : i64, tpu.core_type = #tpu.core_type<tc>, window_params = [{transform_indices = @transform_0, window_bounds = array<i64: 1, 8, 128>}, {pipeline_mode = #tpu.pipeline_mode<synchronous>, transform_indices = @transform_1, window_bounds = array<i64: 2, 128, 384>}, {pipeline_mode = #tpu.pipeline_mode<synchronous>, transform_indices = @transform_2, window_bounds = array<i64: 2, 1, 384>}, {transform_indices = @transform_3, window_bounds = array<i64: 1, 8, 128>}]} {
    %c1_i32 = arith.constant 1 : i32
    %0 = arith.muli %arg1, %c1_i32 : i32
    %c0 = arith.constant 0 : index
    %c0_0 = arith.constant 0 : index
    %c0_1 = arith.constant 0 : index
    %1 = vector.load %arg2[%c0, %c0_0, %c0_1] : memref<1x8x128xf32, #tpu.memory_space<vmem>>, vector<1x8x128xf32>
    %2 = vector.shape_cast %1 : vector<1x8x128xf32> to vector<8x128xf32>
    %3 = arith.truncf %2 : vector<8x128xf32> to vector<8x128xbf16>
    %c0_i32 = arith.constant 0 : i32
    %4 = arith.addi %0, %c0_i32 : i32
    %5 = arith.index_cast %4 : i32 to index
    %c0_2 = arith.constant 0 : index
    %c0_3 = arith.constant 0 : index
    %6 = vector.load %arg3[%5, %c0_2, %c0_3] : memref<2x128x384xbf16, #tpu.memory_space<vmem>>, vector<1x128x384xbf16>
    %7 = vector.shape_cast %6 : vector<1x128x384xbf16> to vector<128x384xbf16>
    %8 = arith.index_cast %4 : i32 to index
    %c0_4 = arith.constant 0 : index
    %c0_5 = arith.constant 0 : index
    %9 = vector.load %arg4[%8, %c0_4, %c0_5] : memref<2x1x384xf32, #tpu.memory_space<vmem>>, vector<1x1x384xf32>
    %10 = vector.shape_cast %9 : vector<1x1x384xf32> to vector<1x384xf32>
    %cst = arith.constant dense<0.000000e+00> : vector<8x384xf32>
    %11 = tpu.matmul %3, %7, %cst {dimension_numbers = #tpu.dot_dimension_numbers<[1], [0], [0], [1], [0, 0, 1, 1], [], []>} : vector<8x128xbf16>, vector<128x384xbf16>, vector<8x384xf32> -> vector<8x384xf32>
    %12 = vector.broadcast %10 : vector<1x384xf32> to vector<8x384xf32>
    %13 = arith.addf %11, %12 : vector<8x384xf32>
    %14 = vector.extract_strided_slice %13 {offsets = [0, 0], sizes = [8, 128], strides = [1, 1]} : vector<8x384xf32> to vector<8x128xf32>
    %15 = vector.extract_strided_slice %13 {offsets = [0, 128], sizes = [8, 128], strides = [1, 1]} : vector<8x384xf32> to vector<8x128xf32>
    %16 = vector.extract_strided_slice %13 {offsets = [0, 256], sizes = [8, 128], strides = [1, 1]} : vector<8x384xf32> to vector<8x128xf32>
    %17 = arith.truncf %14 : vector<8x128xf32> to vector<8x128xbf16>
    %18 = arith.truncf %15 : vector<8x128xf32> to vector<8x128xbf16>
    %19 = arith.truncf %16 : vector<8x128xf32> to vector<8x128xbf16>
    %cst_6 = arith.constant dense<0.000000e+00> : vector<8x8xf32>
    %20 = tpu.matmul %17, %18, %cst_6 {dimension_numbers = #tpu.dot_dimension_numbers<[1], [1], [0], [0], [0, 0, 1, 0], [], []>} : vector<8x128xbf16>, vector<8x128xbf16>, vector<8x8xf32> -> vector<8x8xf32>
    %cst_7 = arith.constant dense<0xFF800000> : vector<8xf32>
    %21 = vector.multi_reduction <maximumf>, %20, %cst_7 [1] : vector<8x8xf32> to vector<8xf32>
    %22 = vector.shape_cast %21 : vector<8xf32> to vector<8x1xf32>
    %23 = vector.broadcast %22 : vector<8x1xf32> to vector<8x8xf32>
    %24 = arith.subf %20, %23 : vector<8x8xf32>
    %25 = math.exp %24 : vector<8x8xf32>
    %cst_8 = arith.constant dense<0.000000e+00> : vector<8xf32>
    %26 = vector.multi_reduction <add>, %25, %cst_8 [1] : vector<8x8xf32> to vector<8xf32>
    %27 = vector.shape_cast %26 : vector<8xf32> to vector<8x1xf32>
    %28 = tpu.reciprocal %27 {approx = true} : vector<8x1xf32> -> vector<8x1xf32>
    %29 = vector.broadcast %28 : vector<8x1xf32> to vector<8x8xf32>
    %30 = arith.mulf %25, %29 : vector<8x8xf32>
    %31 = arith.truncf %30 : vector<8x8xf32> to vector<8x8xbf16>
    %cst_9 = arith.constant dense<0.000000e+00> : vector<8x128xf32>
    %32 = tpu.matmul %31, %19, %cst_9 {dimension_numbers = #tpu.dot_dimension_numbers<[1], [0], [0], [1], [0, 0, 1, 1], [], []>} : vector<8x8xbf16>, vector<8x128xbf16>, vector<8x128xf32> -> vector<8x128xf32>
    %c0_10 = arith.constant 0 : index
    %c0_11 = arith.constant 0 : index
    %c0_12 = arith.constant 0 : index
    %33 = vector.load %arg5[%c0_10, %c0_11, %c0_12] : memref<1x8x128xf32, #tpu.memory_space<vmem>>, vector<1x8x128xf32>
    %34 = vector.shape_cast %33 : vector<1x8x128xf32> to vector<8x128xf32>
    %35 = vector.shape_cast %32 : vector<8x128xf32> to vector<1x8x128xf32>
    tpu.vector_store %arg5[%c0_10, %c0_11, %c0_12], %35 {strides = array<i32>} : memref<1x8x128xf32, #tpu.memory_space<vmem>>, vector<1x8x128xf32>,
    return
  }
  func.func @transform_0(%arg0: i32, %arg1: i32) -> (i32, i32, i32) {
    %c0_i32 = arith.constant 0 : i32
    %c0_i32_0 = arith.constant 0 : i32
    %c0_i32_1 = arith.constant 0 : i32
    return %arg0, %c0_i32, %c0_i32_0 : i32, i32, i32
  }
  func.func @transform_1(%arg0: i32, %arg1: i32) -> (i32, i32, i32) {
    %c0_i32 = arith.constant 0 : i32
    %c0_i32_0 = arith.constant 0 : i32
    %c0_i32_1 = arith.constant 0 : i32
    %c0_i32_2 = arith.constant 0 : i32
    return %c0_i32, %c0_i32_0, %c0_i32_1 : i32, i32, i32
  }
  func.func @transform_2(%arg0: i32, %arg1: i32) -> (i32, i32, i32) {
    %c0_i32 = arith.constant 0 : i32
    %c0_i32_0 = arith.constant 0 : i32
    %c0_i32_1 = arith.constant 0 : i32
    %c0_i32_2 = arith.constant 0 : i32
    return %c0_i32, %c0_i32_0, %c0_i32_1 : i32, i32, i32
  }
  func.func @transform_3(%arg0: i32, %arg1: i32) -> (i32, i32, i32) {
    %c0_i32 = arith.constant 0 : i32
    %c0_i32_0 = arith.constant 0 : i32
    return %arg0, %c0_i32, %arg1 : i32, i32, i32
  }
}

</mosaic_0001>

<llo_original>
// kernel: tpu_custom_call.1
$region0: #{tpu_custom_call.1}
  #allocation0 [shape = 'u32[]', space=smem, size = 0x4, offset = 0x4, fixed_abs, tag = 'smem constant byte address 0x4 - core index']
  #allocation1 [shape = 'u32[144,128]{1,0:T(1,128)}', space=vmem, size = 0x12000, scoped, tag = 'internal scratch']
  %s0 = inlined_call_operand.hbm [shape: f32[2,8,128], index: 0, kind: input, shape index: {}]
  %s1 = inlined_call_operand.hbm [shape: bf16[2,128,384], index: 1, kind: input, shape index: {}]
  %s2 = inlined_call_operand.hbm [shape: f32[2,1,384], index: 2, kind: input, shape index: {}]
  %s3 = inlined_call_operand.hbm [shape: f32[2,8,256], index: 3, kind: output, shape index: {}]
  %s4 = sld [smem:[#allocation0]]
  $region57: #{tpu_custom_call.1} parent=0
    _
  %s6 = ssub.s32 1, %s4
  %s7 = scalar_select 0, %s6, %s4
  $region1: #{tpu_custom_call.1} parent=0
    #allocation2 [shape = 'u8[8192]{0}', space=vmem, size = 0x2000, scoped, tag = 'input window, operand 0']
    #allocation3 [shape = 's32[2]{0}', space=sflag, size = 0x8, scoped, tag = 'scoped memory for tpu_custom_call.1']
    #allocation4 [shape = 's32[2]{0}', space=sflag, size = 0x8, scoped, tag = 'scoped memory for tpu_custom_call.1']
    #allocation5 [shape = 'u8[196608]{0}', space=vmem, size = 0x30000, scoped, tag = 'input window, operand 1, single buffered']
    #allocation6 [shape = 's32[1]{0}', space=sflag, size = 0x4, scoped, tag = 'scoped memory for tpu_custom_call.1']
    #allocation7 [shape = 'u8[3072]{0}', space=vmem, size = 0xc00, scoped, tag = 'input window, operand 2, single buffered']
    #allocation8 [shape = 'u8[8192]{0}', space=vmem, size = 0x2000, scoped, tag = 'output window, operand 0']
    %8 = vsyncpa [#allocation3], 0
    %s9 = scalar_lea.sflag [#allocation3], 1
    %10 = vsyncpa %s9, 0
    %11 = vsyncpa [#allocation6], 0
    %12 = vsyncpa [#allocation4], 0
    %s13 = scalar_lea.sflag [#allocation4], 1
    %14 = vsyncpa %s13, 0
    loop: start=0, step=1, limit=6
    $region2: #{tpu_custom_call.1} parent=1 // loop_pre_header
      _
    $region3: #{tpu_custom_call.1} parent=1 // loop_header
      %s16 = sphi 0, %s20
      %p17 = scmp.ge.s32.totalorder %s16, 6
      %s23 = sphi 0, %s35
      %s24 = sphi 0, %s31
      %s25 = sphi 0, %s23
      %s26 = sphi 0, %s24
      %s27 = sphi 0, %s25
      %s28 = sphi 0, %s26
      %s38 = sphi 0, %s40
      %s41 = sphi 0, %s38
      %s42 = sphi 0, %s41
      %s58 = sphi 0, %s42
      %s62 = sphi 0, %s62
      %s64 = sphi 0, %s62
      %s65 = sphi 0, %s64
      %s79 = sphi 0, %s65
      %s83 = sphi 0, %s83
      %s85 = sphi 0, %s83
      %s86 = sphi 0, %s85
      %s100 = sphi 0, %s86
      %s108 = sphi 0, %s110
      %s111 = sphi 0, %s108
      %s112 = sphi 0, %s111
      %s128 = sphi 0, %s112
    $region4: #{tpu_custom_call.1} parent=1 // loop_header_branch
      %19 = sbr.rel (%p17) target = $region8
    $region5: #{tpu_custom_call.1} parent=1 // loop_body
      %s21 = ssub.s32 %s16, 1
      %s22 = ssub.s32 %s16, 2
      %s29 = sadd.s32 1, %s24
      %p30 = scmp.ge.s32.totalorder %s29, 2
      %s31 = scalar_select %p30, 0, %s29
      %s32 = sadd.s32 1, %s23
      %s33 = scalar_select %p30, %s32, %s23
      %p34 = scmp.ge.s32.totalorder %s33, 2
      %s35 = scalar_select %p34, 0, %s33
      %s36 = ssub.s32 %s23, %s35
      %p37 = scmp.eq.s32.totalorder %s36, 0
      %s39 = sadd.s32 %s38, 1
      %s40 = scalar_select %p37, %s38, %s39
      %p43 = pneg %p37
      %p44 = scmp.eq.s32.totalorder %s16, 3
      %p45 = por %p43, %p44
      %p46 = scmp.ne.s32.totalorder %s38, %s41
      %p47 = scmp.eq.s32.totalorder %s16, 0
      %p48 = por %p46, %p47
      %p49 = scmp.ne.s32.totalorder %s38, %s41
      %p50 = scmp.eq.s32.totalorder %s21, 3
      %p51 = por %p49, %p50
      %p52 = scmp.ne.s32.totalorder %s41, %s42
      %p53 = scmp.eq.s32.totalorder %s21, 0
      %p54 = por %p52, %p53
      %p55 = scmp.ne.s32.totalorder %s41, %s42
      %p56 = scmp.eq.s32.totalorder %s22, 3
      %p57 = por %p55, %p56
      %p59 = scmp.ne.s32.totalorder %s42, %s58
      %p60 = scmp.eq.s32.totalorder %s22, 0
      %p61 = por %p59, %p60
      %s63 = sadd.s32 %s62, 1
      %p66 = scmp.eq.s32.totalorder %s16, 3
      %p67 = scmp.ne.s32.totalorder %s62, %s64
      %p68 = scmp.eq.s32.totalorder %s16, 0
      %p69 = por %p67, %p68
      %p70 = scmp.ne.s32.totalorder %s62, %s64
      %p71 = scmp.eq.s32.totalorder %s21, 3
      %p72 = por %p70, %p71
      %p73 = scmp.ne.s32.totalorder %s64, %s65
      %p74 = scmp.eq.s32.totalorder %s21, 0
      %p75 = por %p73, %p74
      %p76 = scmp.ne.s32.totalorder %s64, %s65
      %p77 = scmp.eq.s32.totalorder %s22, 3
      %p78 = por %p76, %p77
      %p80 = scmp.ne.s32.totalorder %s65, %s79
      %p81 = scmp.eq.s32.totalorder %s22, 0
      %p82 = por %p80, %p81
      %s84 = sadd.s32 %s83, 1
      %p87 = scmp.eq.s32.totalorder %s16, 3
      %p88 = scmp.ne.s32.totalorder %s83, %s85
      %p89 = scmp.eq.s32.totalorder %s16, 0
      %p90 = por %p88, %p89
      %p91 = scmp.ne.s32.totalorder %s83, %s85
      %p92 = scmp.eq.s32.totalorder %s21, 3
      %p93 = por %p91, %p92
      %p94 = scmp.ne.s32.totalorder %s85, %s86
      %p95 = scmp.eq.s32.totalorder %s21, 0
      %p96 = por %p94, %p95
      %p97 = scmp.ne.s32.totalorder %s85, %s86
      %p98 = scmp.eq.s32.totalorder %s22, 3
      %p99 = por %p97, %p98
      %p101 = scmp.ne.s32.totalorder %s86, %s100
      %p102 = scmp.eq.s32.totalorder %s22, 0
      %p103 = por %p101, %p102
      %s104 = ssub.s32 %s23, %s35
      %s105 = ssub.s32 %s24, %s31
      %s106 = sor.u32 %s104, %s105
      %p107 = scmp.eq.s32.totalorder %s106, 0
      %s109 = sadd.s32 %s108, 1
      %s110 = scalar_select %p107, %s108, %s109
      %p113 = pneg %p107
      %p114 = scmp.eq.s32.totalorder %s16, 3
      %p115 = por %p113, %p114
      %p116 = scmp.ne.s32.totalorder %s108, %s111
      %p117 = scmp.eq.s32.totalorder %s16, 0
      %p118 = por %p116, %p117
      %p119 = scmp.ne.s32.totalorder %s108, %s111
      %p120 = scmp.eq.s32.totalorder %s21, 3
      %p121 = por %p119, %p120
      %p122 = scmp.ne.s32.totalorder %s111, %s112
      %p123 = scmp.eq.s32.totalorder %s21, 0
      %p124 = por %p122, %p123
      %p125 = scmp.ne.s32.totalorder %s111, %s112
      %p126 = scmp.eq.s32.totalorder %s22, 3
      %p127 = por %p125, %p126
      %p129 = scmp.ne.s32.totalorder %s112, %s128
      %p130 = scmp.eq.s32.totalorder %s22, 0
      %p131 = por %p129, %p130
      %p132 = scmp.le.s32.totalorder 1, %s16
      %p133 = scmp.lt.s32.totalorder %s16, 5
      %p134 = pnand %p132, %p133
      %p135 = pneg %p134
      // Predicated region
      $region9: #{tpu_custom_call.1} parent=5 // pred_check
        _
      $region10: #{tpu_custom_call.1} parent=5 // pred_check_branch
        %137 = sbr.rel (%p134) target = $region12
      $region11: #{tpu_custom_call.1} parent=5 // pred_region
        %s138 = ssub.s32 %s16, 1
        // Predicated region
        $region13: #{tpu_custom_call.1} parent=11 // pred_check
          %p139 = pneg %p75
        $region14: #{tpu_custom_call.1} parent=11 // pred_check_branch
          %141 = sbr.rel (%p139) target = $region16
        $region15: #{tpu_custom_call.1} parent=11 // pred_region
          %s143 = ssub.s32 6144, 6144
          %144 = vsyncadd [#allocation6], %s143
          %s145 = sshll.u32 [#allocation5], 4
          %s146 = int_to_ptr.vmem [resolvable:$true] %s145
          %151 = dma.hbm_to_vmem [thread:$0]  %s1, 6144, %s146, [#allocation6], 192, 192, 12
        $region16: #{tpu_custom_call.1} parent=11 // pred_fallthru
          _
        // Predicated region
        $region17: #{tpu_custom_call.1} parent=11 // pred_check
          %p152 = pneg %p96
        $region18: #{tpu_custom_call.1} parent=11 // pred_check_branch
          %154 = sbr.rel (%p152) target = $region20
        $region19: #{tpu_custom_call.1} parent=11 // pred_region
          %s156 = ssub.s32 96, 96
          %157 = vsyncadd [#allocation6], %s156
          %s158 = sshll.u32 [#allocation7], 4
          %s159 = int_to_ptr.vmem [resolvable:$true] %s158
          %164 = dma.hbm_to_vmem [thread:$0]  %s2, 96, %s159, [#allocation6], 48, 48, 3
        $region20: #{tpu_custom_call.1} parent=11 // pred_fallthru
          _
      $region12: #{tpu_custom_call.1} parent=5 // pred_fallthru
        _
      %p165 = scmp.lt.s32.totalorder %s16, 4
      // Predicated region
      $region21: #{tpu_custom_call.1} parent=5 // pred_check
        %p166 = pneg %p165
      $region22: #{tpu_custom_call.1} parent=5 // pred_check_branch
        %168 = sbr.rel (%p166) target = $region24
      $region23: #{tpu_custom_call.1} parent=5 // pred_region
        // Predicated region
        $region25: #{tpu_custom_call.1} parent=23 // pred_check
          %p169 = pneg %p48
        $region26: #{tpu_custom_call.1} parent=23 // pred_check_branch
          %171 = sbr.rel (%p169) target = $region28
        $region27: #{tpu_custom_call.1} parent=23 // pred_region
          %s172 = sand.u32 %s38, 1
          %s173 = scalar_lea.sflag [#allocation3], %s172
          %s174 = sand.u32 %s38, 1
          %s175 = smul.addr %s174, 8
          %s176 = scalar_lea.vmem [#allocation2], %s175
          %s178 = ssub.s32 128, 128
          %179 = vsyncadd %s173, %s178
          %s180 = smul.addr %s23, 128
          %s181 = scalar_lea.hbm %s0, %s180
          %s183 = sshll.u32 %s176, 4
          %s184 = int_to_ptr.vmem [resolvable:$true] %s183
          %186 = dma.hbm_to_vmem [thread:$0]  %s181, 128, %s184, %s173
        $region28: #{tpu_custom_call.1} parent=23 // pred_fallthru
          _
      $region24: #{tpu_custom_call.1} parent=5 // pred_fallthru
        _
      %p187 = scmp.le.s32.totalorder 1, %s16
      %p188 = scmp.lt.s32.totalorder %s16, 5
      %p189 = pnand %p187, %p188
      %p190 = pneg %p189
      // Predicated region
      $region29: #{tpu_custom_call.1} parent=5 // pred_check
        _
      $region30: #{tpu_custom_call.1} parent=5 // pred_check_branch
        %192 = sbr.rel (%p189) target = $region32
      $region31: #{tpu_custom_call.1} parent=5 // pred_region
        %s193 = ssub.s32 %s16, 1
        %s194 = sand.u32 %s41, 1
        %s195 = scalar_lea.sflag [#allocation3], %s194
        %s196 = sand.u32 %s41, 1
        %s197 = smul.addr %s196, 8
        %s198 = scalar_lea.vmem [#allocation2], %s197
        // Predicated region
        $region33: #{tpu_custom_call.1} parent=31 // pred_check
          %p199 = pneg %p54
        $region34: #{tpu_custom_call.1} parent=31 // pred_check_branch
          %201 = sbr.rel (%p199) target = $region36
        $region35: #{tpu_custom_call.1} parent=31 // pred_region
          %202 = dma.done %s195, 128
        $region36: #{tpu_custom_call.1} parent=31 // pred_fallthru
          _
        // Predicated region
        $region37: #{tpu_custom_call.1} parent=31 // pred_check
          %p203 = pneg %p75
        $region38: #{tpu_custom_call.1} parent=31 // pred_check_branch
          %205 = sbr.rel (%p203) target = $region40
        $region39: #{tpu_custom_call.1} parent=31 // pred_region
          %206 = dma.done [#allocation6], 6144
        $region40: #{tpu_custom_call.1} parent=31 // pred_fallthru
          _
        // Predicated region
        $region41: #{tpu_custom_call.1} parent=31 // pred_check
          %p207 = pneg %p96
        $region42: #{tpu_custom_call.1} parent=31 // pred_check_branch
          %209 = sbr.rel (%p207) target = $region44
        $region43: #{tpu_custom_call.1} parent=31 // pred_region
          %210 = dma.done [#allocation6], 96
        $region44: #{tpu_custom_call.1} parent=31 // pred_fallthru
          _
        %s211 = sand.u32 %s41, 1
        %s212 = scalar_lea.sflag [#allocation3], %s211
        %s213 = sand.u32 %s41, 1
        %s214 = smul.addr %s213, 8
        %s215 = scalar_lea.vmem [#allocation2], %s214
        %p216 = pneg %p54
        %p217 = pneg %p51
        %p218 = pneg %p75
        %p219 = pneg %p72
        %p220 = pneg %p96
        %p221 = pneg %p93
        %p222 = pneg %p124
        %p223 = pneg %p121
        %s224 = sand.u32 %s111, 1
        %s225 = scalar_lea.sflag [#allocation4], %s224
        %s226 = sand.u32 %s111, 1
        %s227 = smul.addr %s226, 8
        %s228 = scalar_lea.vmem [#allocation8], %s227
        %v230 = vld [vmem:[%s198] sm:$0xff]
        %v231 = vpack.c.bf16 %v230, %v230
        %s232 = smul.u32 %s26, 48
        %s233 = smul.addr %s232, 4
        %s234 = scalar_lea.vmem [#allocation5], %s233
        %v235 = vld [vmem:[%s234] sm:$0xff]
        %v236 = vld [vmem:[%s234 + $0x8] sm:$0xf]
        %v237 = vld [vmem:[%s234 + $0xc] sm:$0xff]
        %v238 = vld [vmem:[%s234 + $0x14] sm:$0xf]
        %v239 = vld [vmem:[%s234 + $0x18] sm:$0xff]
        %v240 = vld [vmem:[%s234 + $0x20] sm:$0xf]
        %v241 = vld [vmem:[%s234 + $0x24] sm:$0xff]
        %v242 = vld [vmem:[%s234 + $0x2c] sm:$0xf]
        %v243 = vld [vmem:[%s234 + $0x30] sm:$0xff]
        %v244 = vld [vmem:[%s234 + $0x38] sm:$0xf]
        %v245 = vld [vmem:[%s234 + $0x3c] sm:$0xff]
        %v246 = vld [vmem:[%s234 + $0x44] sm:$0xf]
        %v247 = vld [vmem:[%s234 + $0x48] sm:$0xff]
        %v248 = vld [vmem:[%s234 + $0x50] sm:$0xf]
        %v249 = vld [vmem:[%s234 + $0x54] sm:$0xff]
        %v250 = vld [vmem:[%s234 + $0x5c] sm:$0xf]
        %v251 = vld [vmem:[%s234 + $0x60] sm:$0xff]
        %v252 = vld [vmem:[%s234 + $0x68] sm:$0xf]
        %v253 = vld [vmem:[%s234 + $0x6c] sm:$0xff]
        %v254 = vld [vmem:[%s234 + $0x74] sm:$0xf]
        %v255 = vld [vmem:[%s234 + $0x78] sm:$0xff]
        %v256 = vld [vmem:[%s234 + $0x80] sm:$0xf]
        %v257 = vld [vmem:[%s234 + $0x84] sm:$0xff]
        %v258 = vld [vmem:[%s234 + $0x8c] sm:$0xf]
        %v259 = vld [vmem:[%s234 + $0x90] sm:$0xff]
        %v260 = vld [vmem:[%s234 + $0x98] sm:$0xf]
        %v261 = vld [vmem:[%s234 + $0x9c] sm:$0xff]
        %v262 = vld [vmem:[%s234 + $0xa4] sm:$0xf]
        %v263 = vld [vmem:[%s234 + $0xa8] sm:$0xff]
        %v264 = vld [vmem:[%s234 + $0xb0] sm:$0xf]
        %v265 = vld [vmem:[%s234 + $0xb4] sm:$0xff]
        %v266 = vld [vmem:[%s234 + $0xbc] sm:$0xf]
        %s267 = smul.u32 %s26, 3
        %s268 = scalar_lea.vmem [#allocation7], %s267
        %v269 = vld [vmem:[%s268] sm:$0x7]
        %v271 = vlaneseq
        %v272 = vshrl.u32 %v271, 7
        %v273 = vsub.s32 0, %v272
        %v274 = vrot.slane %v269, %v273
        %v275 = vlaneseq
        %v276 = vshrl.u32 %v275, 7
        %v277 = vsub.s32 1, %v276
        %v278 = vrot.slane %v269, %v277
        %v279 = vlaneseq
        %v280 = vshrl.u32 %v279, 7
        %v281 = vsub.s32 2, %v280
        %v282 = vrot.slane %v269, %v281
        %v318 = vunpack.c.l.b16 %v235
        %v319 = vunpack.c.h.b16 %v235
        %v320 = vunpack.c.l.b16 %v236
        %v321 = vunpack.c.l.b16 %v237
        %v322 = vunpack.c.h.b16 %v237
        %v323 = vunpack.c.l.b16 %v238
        %v324 = vunpack.c.l.b16 %v239
        %v325 = vunpack.c.h.b16 %v239
        %v326 = vunpack.c.l.b16 %v240
        %v327 = vunpack.c.l.b16 %v241
        %v328 = vunpack.c.h.b16 %v241
        %v329 = vunpack.c.l.b16 %v242
        %v330 = vunpack.c.l.b16 %v243
        %v331 = vunpack.c.h.b16 %v243
        %v332 = vunpack.c.l.b16 %v244
        %v333 = vunpack.c.l.b16 %v245
        %v334 = vunpack.c.h.b16 %v245
        %v335 = vunpack.c.l.b16 %v246
        %v336 = vunpack.c.l.b16 %v247
        %v337 = vunpack.c.h.b16 %v247
        %v338 = vunpack.c.l.b16 %v248
        %v339 = vunpack.c.l.b16 %v249
        %v340 = vunpack.c.h.b16 %v249
        %v341 = vunpack.c.l.b16 %v250
        %v342 = vunpack.c.l.b16 %v251
        %v343 = vunpack.c.h.b16 %v251
        %v344 = vunpack.c.l.b16 %v252
        %v345 = vunpack.c.l.b16 %v253
        %v346 = vunpack.c.h.b16 %v253
        %v347 = vunpack.c.l.b16 %v254
        %v348 = vunpack.c.l.b16 %v255
        %v349 = vunpack.c.h.b16 %v255
        %v350 = vunpack.c.l.b16 %v256
        %v351 = vunpack.c.l.b16 %v257
        %v352 = vunpack.c.h.b16 %v257
        %v353 = vunpack.c.l.b16 %v258
        %v354 = vunpack.c.l.b16 %v259
        %v355 = vunpack.c.h.b16 %v259
        %v356 = vunpack.c.l.b16 %v260
        %v357 = vunpack.c.l.b16 %v261
        %v358 = vunpack.c.h.b16 %v261
        %v359 = vunpack.c.l.b16 %v262
        %v360 = vunpack.c.l.b16 %v263
        %v361 = vunpack.c.h.b16 %v263
        %v362 = vunpack.c.l.b16 %v264
        %v363 = vunpack.c.l.b16 %v265
        %v364 = vunpack.c.h.b16 %v265
        %v365 = vunpack.c.l.b16 %v266
        %v366 = vpack.c.b16 %v321, %v318
        %v367 = vpack.c.b16 %v322, %v319
        %v368 = vpack.c.b16 %v323, %v320
        %v369 = vpack.c.b16 %v327, %v324
        %v370 = vpack.c.b16 %v328, %v325
        %v371 = vpack.c.b16 %v329, %v326
        %v372 = vpack.c.b16 %v333, %v330
        %v373 = vpack.c.b16 %v334, %v331
        %v374 = vpack.c.b16 %v335, %v332
        %v375 = vpack.c.b16 %v339, %v336
        %v376 = vpack.c.b16 %v340, %v337
        %v377 = vpack.c.b16 %v341, %v338
        %v378 = vpack.c.b16 %v345, %v342
        %v379 = vpack.c.b16 %v346, %v343
        %v380 = vpack.c.b16 %v347, %v344
        %v381 = vpack.c.b16 %v351, %v348
        %v382 = vpack.c.b16 %v352, %v349
        %v383 = vpack.c.b16 %v353, %v350
        %v384 = vpack.c.b16 %v357, %v354
        %v385 = vpack.c.b16 %v358, %v355
        %v386 = vpack.c.b16 %v359, %v356
        %v387 = vpack.c.b16 %v363, %v360
        %v388 = vpack.c.b16 %v364, %v361
        %v389 = vpack.c.b16 %v365, %v362
        %414 = vmatprep.subr.bf16.mxu0 %v388
        %415 = vmatpush1.bf16.msra.mxu0 %v387
        %416 = vmatprep.subr.bf16.mxu0 %v385
        %417 = vmatpush1.bf16.msra.mxu0 %v384
        %418 = vmatprep.subr.bf16.mxu0 %v382
        %419 = vmatpush1.bf16.msra.mxu0 %v381
        %420 = vmatprep.subr.bf16.mxu0 %v379
        %421 = vmatpush1.bf16.msra.mxu0 %v378
        %422 = vmatprep.subr.bf16.mxu0 %v376
        %423 = vmatpush1.bf16.msra.mxu0 %v375
        %424 = vmatprep.subr.bf16.mxu0 %v373
        %425 = vmatpush1.bf16.msra.mxu0 %v372
        %426 = vmatprep.subr.bf16.mxu0 %v370
        %427 = vmatpush1.bf16.msra.mxu0 %v369
        %428 = vmatprep.subr.bf16.mxu0 %v367
        %429 = vmatpush1.bf16.msra.mxu0 %v366
        %430 = vmatprep.subr.bf16.mxu0 0
        %431 = vmatpush2.bf16.msra.mxu0 0
        %432 = vmatprep.subr.bf16.mxu0 0
        %433 = vmatpush2.bf16.msra.mxu0 0
        %434 = vmatprep.subr.bf16.mxu0 0
        %435 = vmatpush2.bf16.msra.mxu0 0
        %436 = vmatprep.subr.bf16.mxu0 0
        %437 = vmatpush2.bf16.msra.mxu0 0
        %438 = vmatprep.subr.bf16.mxu0 0
        %439 = vmatpush2.bf16.msra.mxu0 0
        %440 = vmatprep.subr.bf16.mxu0 0
        %441 = vmatpush2.bf16.msra.mxu0 0
        %442 = vmatprep.subr.bf16.mxu0 0
        %443 = vmatpush2.bf16.msra.mxu0 0
        %444 = vmatprep.subr.bf16.mxu0 0
        %445 = vmatpush2.bf16.msra.mxu0 0
        %446 = vmatprep.mubr.bf16.mxu0 0
        %447 = vmatmul.mubr.bf16.gmra.mxu0 %v231
        %v448 = vpop.f32.mrf.mxu0
        %v449 = vadd.f32 %v274, %v448
        %v450 = vpop.f32.mrf.mxu0
        %v451 = vadd.f32 %v278, %v450
        %v452 = vpop.f32.mrf.mxu0
        %v453 = vpop.f32.mrf.mxu0
        %454 = vdwg.mxu0
        %455 = vmatprep.subr.bf16.mxu0 0
        %456 = vmatpush1.bf16.msra.mxu0 %v389
        %457 = vmatprep.subr.bf16.mxu0 0
        %458 = vmatpush1.bf16.msra.mxu0 %v386
        %459 = vmatprep.subr.bf16.mxu0 0
        %460 = vmatpush1.bf16.msra.mxu0 %v383
        %461 = vmatprep.subr.bf16.mxu0 0
        %462 = vmatpush1.bf16.msra.mxu0 %v380
        %463 = vmatprep.subr.bf16.mxu0 0
        %464 = vmatpush1.bf16.msra.mxu0 %v377
        %465 = vmatprep.subr.bf16.mxu0 0
        %466 = vmatpush1.bf16.msra.mxu0 %v374
        %467 = vmatprep.subr.bf16.mxu0 0
        %468 = vmatpush1.bf16.msra.mxu0 %v371
        %469 = vmatprep.subr.bf16.mxu0 0
        %470 = vmatpush1.bf16.msra.mxu0 %v368
        %471 = vmatprep.subr.bf16.mxu0 0
        %472 = vmatpush2.bf16.msra.mxu0 0
        %473 = vmatprep.subr.bf16.mxu0 0
        %474 = vmatpush2.bf16.msra.mxu0 0
        %475 = vmatprep.subr.bf16.mxu0 0
        %476 = vmatpush2.bf16.msra.mxu0 0
        %477 = vmatprep.subr.bf16.mxu0 0
        %478 = vmatpush2.bf16.msra.mxu0 0
        %479 = vmatprep.subr.bf16.mxu0 0
        %480 = vmatpush2.bf16.msra.mxu0 0
        %481 = vmatprep.subr.bf16.mxu0 0
        %482 = vmatpush2.bf16.msra.mxu0 0
        %483 = vmatprep.subr.bf16.mxu0 0
        %484 = vmatpush2.bf16.msra.mxu0 0
        %485 = vmatprep.subr.bf16.mxu0 0
        %486 = vmatpush2.bf16.msra.mxu0 0
        %487 = vmatprep.mubr.bf16.mxu0 0
        %488 = vmatmul.mubr.bf16.gmra.mxu0 %v231
        %v489 = vpop.f32.mrf.mxu0
        %v490 = vadd.f32 %v282, %v489
        %v491 = vpop.f32.mrf.mxu0
        %v492 = vpop.f32.mrf.mxu0
        %v493 = vpop.f32.mrf.mxu0
        %494 = vdwg.mxu0
        %v495 = vpack.c.bf16 %v449, %v449
        %v496 = vpack.c.bf16 %v451, %v451
        %v497 = vpack.c.bf16 %v490, %v490
        %498 = vmatprep.subr.bf16.mxu0 0
        %499 = vmatpush1.bf16.xpose.msra.mxu0 0
        %500 = vmatprep.subr.bf16.mxu0 0
        %501 = vmatpush1.bf16.xpose.msra.mxu0 0
        %502 = vmatprep.subr.bf16.mxu0 0
        %503 = vmatpush1.bf16.xpose.msra.mxu0 0
        %504 = vmatprep.subr.bf16.mxu0 0
        %505 = vmatpush1.bf16.xpose.msra.mxu0 0
        %506 = vmatprep.subr.bf16.mxu0 0
        %507 = vmatpush1.bf16.xpose.msra.mxu0 0
        %508 = vmatprep.subr.bf16.mxu0 0
        %509 = vmatpush1.bf16.xpose.msra.mxu0 0
        %510 = vmatprep.subr.bf16.mxu0 0
        %511 = vmatpush1.bf16.xpose.msra.mxu0 0
        %512 = vmatprep.subr.bf16.mxu0 0
        %513 = vmatpush1.bf16.xpose.msra.mxu0 %v496
        %514 = vmatprep.subr.bf16.mxu0 0
        %515 = vmatpush2.bf16.xpose.msra.mxu0 0
        %516 = vmatprep.subr.bf16.mxu0 0
        %517 = vmatpush2.bf16.xpose.msra.mxu0 0
        %518 = vmatprep.subr.bf16.mxu0 0
        %519 = vmatpush2.bf16.xpose.msra.mxu0 0
        %520 = vmatprep.subr.bf16.mxu0 0
        %521 = vmatpush2.bf16.xpose.msra.mxu0 0
        %522 = vmatprep.subr.bf16.mxu0 0
        %523 = vmatpush2.bf16.xpose.msra.mxu0 0
        %524 = vmatprep.subr.bf16.mxu0 0
        %525 = vmatpush2.bf16.xpose.msra.mxu0 0
        %526 = vmatprep.subr.bf16.mxu0 0
        %527 = vmatpush2.bf16.xpose.msra.mxu0 0
        %528 = vmatprep.subr.bf16.mxu0 0
        %529 = vmatpush2.bf16.xpose.msra.mxu0 0
        %530 = vmatprep.mubr.bf16.mxu0 0
        %531 = vmatmul.mubr.bf16.gmra.mxu0 %v495
        %v532 = vpop.f32.mrf.mxu0
        %v533 = vadd.f32 0.0, %v532
        %v534 = vpop.f32.mrf.mxu0
        %v535 = vpop.f32.mrf.mxu0
        %v536 = vpop.f32.mrf.mxu0
        %537 = vdwg.mxu0
        %vm538 = vcmask 64512
        %v539 = vsel %vm538, %v533, -inf
        %540 = vmax.xlane.f32.xlu0 %v539
        %v541 = vpop.xlane.xlu0 %540
        %v542 = vsub.f32 %v533, %v541
        %v543 = vmul.f32 %v542, 1.442695
        %v544 = vpow.pop %v543
        %v545 = vsel %vm538, %v544, 0.0
        %546 = vadd.xlane.f32.xlu0 %v545
        %v547 = vpop.xlane.xlu0 %546
        %v548 = vrcp.pop %v547
        %v549 = vmul.f32 %v544, %v548
        %v550 = vpack.c.bf16 %v549, %v549
        %v552 = vsel %vm538, %v550, 0
        %vm554 = vcmask 1043456
        %v556 = vsel %vm554, %v497, 0
        %558 = vmatprep.subr.bf16.mxu0 0
        %559 = vmatpush1.bf16.msra.mxu0 0
        %560 = vmatprep.subr.bf16.mxu0 0
        %561 = vmatpush1.bf16.msra.mxu0 0
        %562 = vmatprep.subr.bf16.mxu0 0
        %563 = vmatpush1.bf16.msra.mxu0 0
        %564 = vmatprep.subr.bf16.mxu0 0
        %565 = vmatpush1.bf16.msra.mxu0 0
        %566 = vmatprep.subr.bf16.mxu0 0
        %567 = vmatpush1.bf16.msra.mxu0 0
        %568 = vmatprep.subr.bf16.mxu0 0
        %569 = vmatpush1.bf16.msra.mxu0 0
        %570 = vmatprep.subr.bf16.mxu0 0
        %571 = vmatpush1.bf16.msra.mxu0 0
        %572 = vmatprep.subr.bf16.mxu0 0
        %573 = vmatpush1.bf16.msra.mxu0 %v556
        %574 = vmatprep.subr.bf16.mxu0 0
        %575 = vmatpush2.bf16.msra.mxu0 0
        %576 = vmatprep.subr.bf16.mxu0 0
        %577 = vmatpush2.bf16.msra.mxu0 0
        %578 = vmatprep.subr.bf16.mxu0 0
        %579 = vmatpush2.bf16.msra.mxu0 0
        %580 = vmatprep.subr.bf16.mxu0 0
        %581 = vmatpush2.bf16.msra.mxu0 0
        %582 = vmatprep.subr.bf16.mxu0 0
        %583 = vmatpush2.bf16.msra.mxu0 0
        %584 = vmatprep.subr.bf16.mxu0 0
        %585 = vmatpush2.bf16.msra.mxu0 0
        %586 = vmatprep.subr.bf16.mxu0 0
        %587 = vmatpush2.bf16.msra.mxu0 0
        %588 = vmatprep.subr.bf16.mxu0 0
        %589 = vmatpush2.bf16.msra.mxu0 0
        %590 = vmatprep.mubr.bf16.mxu0 0
        %591 = vmatmul.mubr.bf16.gmra.mxu0 %v552
        %v592 = vpop.f32.mrf.mxu0
        %v593 = vadd.f32 0.0, %v592
        %v594 = vpop.f32.mrf.mxu0
        %v595 = vpop.f32.mrf.mxu0
        %v596 = vpop.f32.mrf.mxu0
        %597 = vdwg.mxu0
        %598 = vst [vmem:[%s228] sm:$0xff] %v593
        %s599 = sand.u32 %s111, 1
        %s600 = scalar_lea.sflag [#allocation4], %s599
        %s601 = sand.u32 %s111, 1
        %s602 = smul.addr %s601, 8
        %s603 = scalar_lea.vmem [#allocation8], %s602
        // Predicated region
        $region45: #{tpu_custom_call.1} parent=31 // pred_check
          %p604 = pneg %p121
        $region46: #{tpu_custom_call.1} parent=31 // pred_check_branch
          %606 = sbr.rel (%p604) target = $region48
        $region47: #{tpu_custom_call.1} parent=31 // pred_region
          %s608 = ssub.s32 128, 128
          %609 = vsyncadd %s600, %s608
          %s610 = smul.addr %s25, 2
          %s611 = sadd.s32 %s26, %s610
          %s612 = smul.addr %s611, 128
          %s613 = scalar_lea.hbm %s3, %s612
          %s615 = sshll.u32 %s603, 4
          %s616 = int_to_ptr.vmem [resolvable:$true] %s615
          %618 = dma.vmem_to_hbm [thread:$0]  %s616, 128, %s613, %s600
        $region48: #{tpu_custom_call.1} parent=31 // pred_fallthru
          _
      $region32: #{tpu_custom_call.1} parent=5 // pred_fallthru
        _
      %p619 = scmp.le.s32.totalorder 2, %s16
      // Predicated region
      $region49: #{tpu_custom_call.1} parent=5 // pred_check
        %p620 = pneg %p619
      $region50: #{tpu_custom_call.1} parent=5 // pred_check_branch
        %622 = sbr.rel (%p620) target = $region52
      $region51: #{tpu_custom_call.1} parent=5 // pred_region
        %s623 = ssub.s32 %s16, 2
        // Predicated region
        $region53: #{tpu_custom_call.1} parent=51 // pred_check
          %p624 = pneg %p127
        $region54: #{tpu_custom_call.1} parent=51 // pred_check_branch
          %626 = sbr.rel (%p624) target = $region56
        $region55: #{tpu_custom_call.1} parent=51 // pred_region
          %s627 = sand.u32 %s112, 1
          %s628 = scalar_lea.sflag [#allocation4], %s627
          %s629 = sand.u32 %s112, 1
          %s630 = smul.addr %s629, 8
          %s631 = scalar_lea.vmem [#allocation8], %s630
          %632 = dma.done %s628, 128
        $region56: #{tpu_custom_call.1} parent=51 // pred_fallthru
          _
      $region52: #{tpu_custom_call.1} parent=5 // pred_fallthru
        _
    $region6: #{tpu_custom_call.1} parent=1 // loop_footer
      %s20 = sadd.s32 1, %s16
    $region7: #{tpu_custom_call.1} parent=1 // loop_footer_branch
      %15 = sbr.rel target = $region3
    $region8: #{tpu_custom_call.1} parent=1 // loop_exit
      _
    %633 = vsyncpa [#allocation3], 1
    %s634 = scalar_lea.sflag [#allocation3], 1
    %635 = vsyncpa %s634, 1
    %636 = vsyncpa [#allocation6], 1
    %637 = vsyncpa [#allocation4], 1
    %s638 = scalar_lea.sflag [#allocation4], 1
    %639 = vsyncpa %s638, 1

// kernel: tpu_custom_call.1
$region0: #{tpu_custom_call.1}
  #allocation0 [shape = 'u32[]', space=smem, size = 0x4, offset = 0x4, fixed_abs, tag = 'smem constant byte address 0x4 - core index']
  #allocation1 [shape = 'u32[144,128]{1,0:T(1,128)}', space=vmem, size = 0x12000, scoped, tag = 'internal scratch']
  %s0 = inlined_call_operand.hbm [shape: f32[2,8,128], index: 0, kind: input, shape index: {}]
  %s1 = inlined_call_operand.hbm [shape: bf16[2,128,384], index: 1, kind: input, shape index: {}]
  %s2 = inlined_call_operand.hbm [shape: f32[2,1,384], index: 2, kind: input, shape index: {}]
  %s3 = inlined_call_operand.hbm [shape: f32[2,8,256], index: 3, kind: output, shape index: {}]
  %s4 = sld [smem:[#allocation0]]
  $region57: #{tpu_custom_call.1} parent=0
    _
  %s6 = ssub.s32 1, %s4
  %s7 = scalar_select 0, %s6, %s4
  $region1: #{tpu_custom_call.1} parent=0
    #allocation2 [shape = 'u8[8192]{0}', space=vmem, size = 0x2000, scoped, tag = 'input window, operand 0']
    #allocation3 [shape = 's32[2]{0}', space=sflag, size = 0x8, scoped, tag = 'scoped memory for tpu_custom_call.1']
    #allocation4 [shape = 's32[2]{0}', space=sflag, size = 0x8, scoped, tag = 'scoped memory for tpu_custom_call.1']
    #allocation5 [shape = 'u8[196608]{0}', space=vmem, size = 0x30000, scoped, tag = 'input window, operand 1, single buffered']
    #allocation6 [shape = 's32[1]{0}', space=sflag, size = 0x4, scoped, tag = 'scoped memory for tpu_custom_call.1']
    #allocation7 [shape = 'u8[3072]{0}', space=vmem, size = 0xc00, scoped, tag = 'input window, operand 2, single buffered']
    #allocation8 [shape = 'u8[8192]{0}', space=vmem, size = 0x2000, scoped, tag = 'output window, operand 0']
    %8 = vsyncpa [#allocation3], 0
    %s9 = scalar_lea.sflag [#allocation3], 1
    %10 = vsyncpa %s9, 0
    %11 = vsyncpa [#allocation6], 0
    %12 = vsyncpa [#allocation4], 0
    %s13 = scalar_lea.sflag [#allocation4], 1
    %14 = vsyncpa %s13, 0
    loop: start=0, step=1, limit=6
    $region2: #{tpu_custom_call.1} parent=1 // loop_pre_header
      _
    $region3: #{tpu_custom_call.1} parent=1 // loop_header
      %s16 = sphi 0, %s20
      %p17 = scmp.ge.s32.totalorder %s16, 6
      %s23 = sphi 0, %s35
      %s24 = sphi 0, %s31
      %s25 = sphi 0, %s23
      %s26 = sphi 0, %s24
      %s27 = sphi 0, %s25
      %s28 = sphi 0, %s26
      %s38 = sphi 0, %s40
      %s41 = sphi 0, %s38
      %s42 = sphi 0, %s41
      %s58 = sphi 0, %s42
      %s62 = sphi 0, %s62
      %s64 = sphi 0, %s62
      %s65 = sphi 0, %s64
      %s79 = sphi 0, %s65
      %s83 = sphi 0, %s83
      %s85 = sphi 0, %s83
      %s86 = sphi 0, %s85
      %s100 = sphi 0, %s86
      %s108 = sphi 0, %s110
      %s111 = sphi 0, %s108
      %s112 = sphi 0, %s111
      %s128 = sphi 0, %s112
    $region4: #{tpu_custom_call.1} parent=1 // loop_header_branch
      %19 = sbr.rel (%p17) target = $region8
    $region5: #{tpu_custom_call.1} parent=1 // loop_body
      %s21 = ssub.s32 %s16, 1
      %s22 = ssub.s32 %s16, 2
      %s29 = sadd.s32 1, %s24
      %p30 = scmp.ge.s32.totalorder %s29, 2
      %s31 = scalar_select %p30, 0, %s29
      %s32 = sadd.s32 1, %s23
      %s33 = scalar_select %p30, %s32, %s23
      %p34 = scmp.ge.s32.totalorder %s33, 2
      %s35 = scalar_select %p34, 0, %s33
      %s36 = ssub.s32 %s23, %s35
      %p37 = scmp.eq.s32.totalorder %s36, 0
      %s39 = sadd.s32 %s38, 1
      %s40 = scalar_select %p37, %s38, %s39
      %p43 = pneg %p37
      %p44 = scmp.eq.s32.totalorder %s16, 3
      %p45 = por %p43, %p44
      %p46 = scmp.ne.s32.totalorder %s38, %s41
      %p47 = scmp.eq.s32.totalorder %s16, 0
      %p48 = por %p46, %p47
      %p49 = scmp.ne.s32.totalorder %s38, %s41
      %p50 = scmp.eq.s32.totalorder %s21, 3
      %p51 = por %p49, %p50
      %p52 = scmp.ne.s32.totalorder %s41, %s42
      %p53 = scmp.eq.s32.totalorder %s21, 0
      %p54 = por %p52, %p53
      %p55 = scmp.ne.s32.totalorder %s41, %s42
      %p56 = scmp.eq.s32.totalorder %s22, 3
      %p57 = por %p55, %p56
      %p59 = scmp.ne.s32.totalorder %s42, %s58
      %p60 = scmp.eq.s32.totalorder %s22, 0
      %p61 = por %p59, %p60
      %s63 = sadd.s32 %s62, 1
      %p66 = scmp.eq.s32.totalorder %s16, 3
      %p67 = scmp.ne.s32.totalorder %s62, %s64
      %p68 = scmp.eq.s32.totalorder %s16, 0
      %p69 = por %p67, %p68
      %p70 = scmp.ne.s32.totalorder %s62, %s64
      %p71 = scmp.eq.s32.totalorder %s21, 3
      %p72 = por %p70, %p71
      %p73 = scmp.ne.s32.totalorder %s64, %s65
      %p74 = scmp.eq.s32.totalorder %s21, 0
      %p75 = por %p73, %p74
      %p76 = scmp.ne.s32.totalorder %s64, %s65
      %p77 = scmp.eq.s32.totalorder %s22, 3
      %p78 = por %p76, %p77
      %p80 = scmp.ne.s32.totalorder %s65, %s79
      %p81 = scmp.eq.s32.totalorder %s22, 0
      %p82 = por %p80, %p81
      %s84 = sadd.s32 %s83, 1
      %p87 = scmp.eq.s32.totalorder %s16, 3
      %p88 = scmp.ne.s32.totalorder %s83, %s85
      %p89 = scmp.eq.s32.totalorder %s16, 0
      %p90 = por %p88, %p89
      %p91 = scmp.ne.s32.totalorder %s83, %s85
      %p92 = scmp.eq.s32.totalorder %s21, 3
      %p93 = por %p91, %p92
      %p94 = scmp.ne.s32.totalorder %s85, %s86
      %p95 = scmp.eq.s32.totalorder %s21, 0
      %p96 = por %p94, %p95
      %p97 = scmp.ne.s32.totalorder %s85, %s86
      %p98 = scmp.eq.s32.totalorder %s22, 3
      %p99 = por %p97, %p98
      %p101 = scmp.ne.s32.totalorder %s86, %s100
      %p102 = scmp.eq.s32.totalorder %s22, 0
      %p103 = por %p101, %p102
      %s104 = ssub.s32 %s23, %s35
      %s105 = ssub.s32 %s24, %s31
      %s106 = sor.u32 %s104, %s105
      %p107 = scmp.eq.s32.totalorder %s106, 0
      %s109 = sadd.s32 %s108, 1
      %s110 = scalar_select %p107, %s108, %s109
      %p113 = pneg %p107
      %p114 = scmp.eq.s32.totalorder %s16, 3
      %p115 = por %p113, %p114
      %p116 = scmp.ne.s32.totalorder %s108, %s111
      %p117 = scmp.eq.s32.totalorder %s16, 0
      %p118 = por %p116, %p117
      %p119 = scmp.ne.s32.totalorder %s108, %s111
      %p120 = scmp.eq.s32.totalorder %s21, 3
      %p121 = por %p119, %p120
      %p122 = scmp.ne.s32.totalorder %s111, %s112
      %p123 = scmp.eq.s32.totalorder %s21, 0
      %p124 = por %p122, %p123
      %p125 = scmp.ne.s32.totalorder %s111, %s112
      %p126 = scmp.eq.s32.totalorder %s22, 3
      %p127 = por %p125, %p126
      %p129 = scmp.ne.s32.totalorder %s112, %s128
      %p130 = scmp.eq.s32.totalorder %s22, 0
      %p131 = por %p129, %p130
      %p132 = scmp.le.s32.totalorder 1, %s16
      %p133 = scmp.lt.s32.totalorder %s16, 5
      %p134 = pnand %p132, %p133
      %p135 = pneg %p134
      // Predicated region
      $region9: #{tpu_custom_call.1} parent=5 // pred_check
        _
      $region10: #{tpu_custom_call.1} parent=5 // pred_check_branch
        %137 = sbr.rel (%p134) target = $region12
      $region11: #{tpu_custom_call.1} parent=5 // pred_region
        %s138 = ssub.s32 %s16, 1
        // Predicated region
        $region13: #{tpu_custom_call.1} parent=11 // pred_check
          %p139 = pneg %p75
        $region14: #{tpu_custom_call.1} parent=11 // pred_check_branch
          %141 = sbr.rel (%p139) target = $region16
        $region15: #{tpu_custom_call.1} parent=11 // pred_region
          %s143 = ssub.s32 6144, 6144
          %144 = vsyncadd [#allocation6], %s143
          %s145 = sshll.u32 [#allocation5], 4
          %s146 = int_to_ptr.vmem [resolvable:$true] %s145
          %151 = dma.hbm_to_vmem [thread:$0]  %s1, 6144, %s146, [#allocation6], 192, 192, 12
        $region16: #{tpu_custom_call.1} parent=11 // pred_fallthru
          _
        // Predicated region
        $region17: #{tpu_custom_call.1} parent=11 // pred_check
          %p152 = pneg %p96
        $region18: #{tpu_custom_call.1} parent=11 // pred_check_branch
          %154 = sbr.rel (%p152) target = $region20
        $region19: #{tpu_custom_call.1} parent=11 // pred_region
          %s156 = ssub.s32 96, 96
          %157 = vsyncadd [#allocation6], %s156
          %s158 = sshll.u32 [#allocation7], 4
          %s159 = int_to_ptr.vmem [resolvable:$true] %s158
          %164 = dma.hbm_to_vmem [thread:$0]  %s2, 96, %s159, [#allocation6], 48, 48, 3
        $region20: #{tpu_custom_call.1} parent=11 // pred_fallthru
          _
      $region12: #{tpu_custom_call.1} parent=5 // pred_fallthru
        _
      %p165 = scmp.lt.s32.totalorder %s16, 4
      // Predicated region
      $region21: #{tpu_custom_call.1} parent=5 // pred_check
        %p166 = pneg %p165
      $region22: #{tpu_custom_call.1} parent=5 // pred_check_branch
        %168 = sbr.rel (%p166) target = $region24
      $region23: #{tpu_custom_call.1} parent=5 // pred_region
        // Predicated region
        $region25: #{tpu_custom_call.1} parent=23 // pred_check
          %p169 = pneg %p48
        $region26: #{tpu_custom_call.1} parent=23 // pred_check_branch
          %171 = sbr.rel (%p169) target = $region28
        $region27: #{tpu_custom_call.1} parent=23 // pred_region
          %s172 = sand.u32 %s38, 1
          %s173 = scalar_lea.sflag [#allocation3], %s172
          %s174 = sand.u32 %s38, 1
          %s175 = smul.addr %s174, 8
          %s176 = scalar_lea.vmem [#allocation2], %s175
          %s178 = ssub.s32 128, 128
          %179 = vsyncadd %s173, %s178
          %s180 = smul.addr %s23, 128
          %s181 = scalar_lea.hbm %s0, %s180
          %s183 = sshll.u32 %s176, 4
          %s184 = int_to_ptr.vmem [resolvable:$true] %s183
          %186 = dma.hbm_to_vmem [thread:$0]  %s181, 128, %s184, %s173
        $region28: #{tpu_custom_call.1} parent=23 // pred_fallthru
          _
      $region24: #{tpu_custom_call.1} parent=5 // pred_fallthru
        _
      %p187 = scmp.le.s32.totalorder 1, %s16
      %p188 = scmp.lt.s32.totalorder %s16, 5
      %p189 = pnand %p187, %p188
      %p190 = pneg %p189
      // Predicated region
      $region29: #{tpu_custom_call.1} parent=5 // pred_check
        _
      $region30: #{tpu_custom_call.1} parent=5 // pred_check_branch
        %192 = sbr.rel (%p189) target = $region32
      $region31: #{tpu_custom_call.1} parent=5 // pred_region
        %s193 = ssub.s32 %s16, 1
        %s194 = sand.u32 %s41, 1
        %s195 = scalar_lea.sflag [#allocation3], %s194
        %s196 = sand.u32 %s41, 1
        %s197 = smul.addr %s196, 8
        %s198 = scalar_lea.vmem [#allocation2], %s197
        // Predicated region
        $region33: #{tpu_custom_call.1} parent=31 // pred_check
          %p199 = pneg %p54
        $region34: #{tpu_custom_call.1} parent=31 // pred_check_branch
          %201 = sbr.rel (%p199) target = $region36
        $region35: #{tpu_custom_call.1} parent=31 // pred_region
          %202 = dma.done %s195, 128
        $region36: #{tpu_custom_call.1} parent=31 // pred_fallthru
          _
        // Predicated region
        $region37: #{tpu_custom_call.1} parent=31 // pred_check
          %p203 = pneg %p75
        $region38: #{tpu_custom_call.1} parent=31 // pred_check_branch
          %205 = sbr.rel (%p203) target = $region40
        $region39: #{tpu_custom_call.1} parent=31 // pred_region
          %206 = dma.done [#allocation6], 6144
        $region40: #{tpu_custom_call.1} parent=31 // pred_fallthru
          _
        // Predicated region
        $region41: #{tpu_custom_call.1} parent=31 // pred_check
          %p207 = pneg %p96
        $region42: #{tpu_custom_call.1} parent=31 // pred_check_branch
          %209 = sbr.rel (%p207) target = $region44
        $region43: #{tpu_custom_call.1} parent=31 // pred_region
          %210 = dma.done [#allocation6], 96
        $region44: #{tpu_custom_call.1} parent=31 // pred_fallthru
          _
        %s211 = sand.u32 %s41, 1
        %s212 = scalar_lea.sflag [#allocation3], %s211
        %s213 = sand.u32 %s41, 1
        %s214 = smul.addr %s213, 8
        %s215 = scalar_lea.vmem [#allocation2], %s214
        %p216 = pneg %p54
        %p217 = pneg %p51
        %p218 = pneg %p75
        %p219 = pneg %p72
        %p220 = pneg %p96
        %p221 = pneg %p93
        %p222 = pneg %p124
        %p223 = pneg %p121
        %s224 = sand.u32 %s111, 1
        %s225 = scalar_lea.sflag [#allocation4], %s224
        %s226 = sand.u32 %s111, 1
        %s227 = smul.addr %s226, 8
        %s228 = scalar_lea.vmem [#allocation8], %s227
        %v230 = vld [vmem:[%s198] sm:$0xff]
        %v231 = vpack.c.bf16 %v230, %v230
        %s232 = smul.u32 %s26, 48
        %s233 = smul.addr %s232, 4
        %s234 = scalar_lea.vmem [#allocation5], %s233
        %v235 = vld [vmem:[%s234] sm:$0xff]
        %v236 = vld [vmem:[%s234 + $0x8] sm:$0xf]
        %v237 = vld [vmem:[%s234 + $0xc] sm:$0xff]
        %v238 = vld [vmem:[%s234 + $0x14] sm:$0xf]
        %v239 = vld [vmem:[%s234 + $0x18] sm:$0xff]
        %v240 = vld [vmem:[%s234 + $0x20] sm:$0xf]
        %v241 = vld [vmem:[%s234 + $0x24] sm:$0xff]
        %v242 = vld [vmem:[%s234 + $0x2c] sm:$0xf]
        %v243 = vld [vmem:[%s234 + $0x30] sm:$0xff]
        %v244 = vld [vmem:[%s234 + $0x38] sm:$0xf]
        %v245 = vld [vmem:[%s234 + $0x3c] sm:$0xff]
        %v246 = vld [vmem:[%s234 + $0x44] sm:$0xf]
        %v247 = vld [vmem:[%s234 + $0x48] sm:$0xff]
        %v248 = vld [vmem:[%s234 + $0x50] sm:$0xf]
        %v249 = vld [vmem:[%s234 + $0x54] sm:$0xff]
        %v250 = vld [vmem:[%s234 + $0x5c] sm:$0xf]
        %v251 = vld [vmem:[%s234 + $0x60] sm:$0xff]
        %v252 = vld [vmem:[%s234 + $0x68] sm:$0xf]
        %v253 = vld [vmem:[%s234 + $0x6c] sm:$0xff]
        %v254 = vld [vmem:[%s234 + $0x74] sm:$0xf]
        %v255 = vld [vmem:[%s234 + $0x78] sm:$0xff]
        %v256 = vld [vmem:[%s234 + $0x80] sm:$0xf]
        %v257 = vld [vmem:[%s234 + $0x84] sm:$0xff]
        %v258 = vld [vmem:[%s234 + $0x8c] sm:$0xf]
        %v259 = vld [vmem:[%s234 + $0x90] sm:$0xff]
        %v260 = vld [vmem:[%s234 + $0x98] sm:$0xf]
        %v261 = vld [vmem:[%s234 + $0x9c] sm:$0xff]
        %v262 = vld [vmem:[%s234 + $0xa4] sm:$0xf]
        %v263 = vld [vmem:[%s234 + $0xa8] sm:$0xff]
        %v264 = vld [vmem:[%s234 + $0xb0] sm:$0xf]
        %v265 = vld [vmem:[%s234 + $0xb4] sm:$0xff]
        %v266 = vld [vmem:[%s234 + $0xbc] sm:$0xf]
        %s267 = smul.u32 %s26, 3
        %s268 = scalar_lea.vmem [#allocation7], %s267
        %v269 = vld [vmem:[%s268] sm:$0x7]
        %v271 = vlaneseq
        %v272 = vshrl.u32 %v271, 7
        %v273 = vsub.s32 0, %v272
        %v274 = vrot.slane %v269, %v273
        %v275 = vlaneseq
        %v276 = vshrl.u32 %v275, 7
        %v277 = vsub.s32 1, %v276
        %v278 = vrot.slane %v269, %v277
        %v279 = vlaneseq
        %v280 = vshrl.u32 %v279, 7
        %v281 = vsub.s32 2, %v280
        %v282 = vrot.slane %v269, %v281
        %v318 = vunpack.c.l.b16 %v235
        %v319 = vunpack.c.h.b16 %v235
        %v320 = vunpack.c.l.b16 %v236
        %v321 = vunpack.c.l.b16 %v237
        %v322 = vunpack.c.h.b16 %v237
        %v323 = vunpack.c.l.b16 %v238
        %v324 = vunpack.c.l.b16 %v239
        %v325 = vunpack.c.h.b16 %v239
        %v326 = vunpack.c.l.b16 %v240
        %v327 = vunpack.c.l.b16 %v241
        %v328 = vunpack.c.h.b16 %v241
        %v329 = vunpack.c.l.b16 %v242
        %v330 = vunpack.c.l.b16 %v243
        %v331 = vunpack.c.h.b16 %v243
        %v332 = vunpack.c.l.b16 %v244
        %v333 = vunpack.c.l.b16 %v245
        %v334 = vunpack.c.h.b16 %v245
        %v335 = vunpack.c.l.b16 %v246
        %v336 = vunpack.c.l.b16 %v247
        %v337 = vunpack.c.h.b16 %v247
        %v338 = vunpack.c.l.b16 %v248
        %v339 = vunpack.c.l.b16 %v249
        %v340 = vunpack.c.h.b16 %v249
        %v341 = vunpack.c.l.b16 %v250
        %v342 = vunpack.c.l.b16 %v251
        %v343 = vunpack.c.h.b16 %v251
        %v344 = vunpack.c.l.b16 %v252
        %v345 = vunpack.c.l.b16 %v253
        %v346 = vunpack.c.h.b16 %v253
        %v347 = vunpack.c.l.b16 %v254
        %v348 = vunpack.c.l.b16 %v255
        %v349 = vunpack.c.h.b16 %v255
        %v350 = vunpack.c.l.b16 %v256
        %v351 = vunpack.c.l.b16 %v257
        %v352 = vunpack.c.h.b16 %v257
        %v353 = vunpack.c.l.b16 %v258
        %v354 = vunpack.c.l.b16 %v259
        %v355 = vunpack.c.h.b16 %v259
        %v356 = vunpack.c.l.b16 %v260
        %v357 = vunpack.c.l.b16 %v261
        %v358 = vunpack.c.h.b16 %v261
        %v359 = vunpack.c.l.b16 %v262
        %v360 = vunpack.c.l.b16 %v263
        %v361 = vunpack.c.h.b16 %v263
        %v362 = vunpack.c.l.b16 %v264
        %v363 = vunpack.c.l.b16 %v265
        %v364 = vunpack.c.h.b16 %v265
        %v365 = vunpack.c.l.b16 %v266
        %v366 = vpack.c.b16 %v321, %v318
        %v367 = vpack.c.b16 %v322, %v319
        %v368 = vpack.c.b16 %v323, %v320
        %v369 = vpack.c.b16 %v327, %v324
        %v370 = vpack.c.b16 %v328, %v325
        %v371 = vpack.c.b16 %v329, %v326
        %v372 = vpack.c.b16 %v333, %v330
        %v373 = vpack.c.b16 %v334, %v331
        %v374 = vpack.c.b16 %v335, %v332
        %v375 = vpack.c.b16 %v339, %v336
        %v376 = vpack.c.b16 %v340, %v337
        %v377 = vpack.c.b16 %v341, %v338
        %v378 = vpack.c.b16 %v345, %v342
        %v379 = vpack.c.b16 %v346, %v343
        %v380 = vpack.c.b16 %v347, %v344
        %v381 = vpack.c.b16 %v351, %v348
        %v382 = vpack.c.b16 %v352, %v349
        %v383 = vpack.c.b16 %v353, %v350
        %v384 = vpack.c.b16 %v357, %v354
        %v385 = vpack.c.b16 %v358, %v355
        %v386 = vpack.c.b16 %v359, %v356
        %v387 = vpack.c.b16 %v363, %v360
        %v388 = vpack.c.b16 %v364, %v361
        %v389 = vpack.c.b16 %v365, %v362
        %414 = vmatprep.subr.bf16.mxu0 %v388
        %415 = vmatpush1.bf16.msra.mxu0 %v387
        %416 = vmatprep.subr.bf16.mxu0 %v385
        %417 = vmatpush1.bf16.msra.mxu0 %v384
        %418 = vmatprep.subr.bf16.mxu0 %v382
        %419 = vmatpush1.bf16.msra.mxu0 %v381
        %420 = vmatprep.subr.bf16.mxu0 %v379
        %421 = vmatpush1.bf16.msra.mxu0 %v378
        %422 = vmatprep.subr.bf16.mxu0 %v376
        %423 = vmatpush1.bf16.msra.mxu0 %v375
        %424 = vmatprep.subr.bf16.mxu0 %v373
        %425 = vmatpush1.bf16.msra.mxu0 %v372
        %426 = vmatprep.subr.bf16.mxu0 %v370
        %427 = vmatpush1.bf16.msra.mxu0 %v369
        %428 = vmatprep.subr.bf16.mxu0 %v367
        %429 = vmatpush1.bf16.msra.mxu0 %v366
        %430 = vmatprep.subr.bf16.mxu0 0
        %431 = vmatpush2.bf16.msra.mxu0 0
        %432 = vmatprep.subr.bf16.mxu0 0
        %433 = vmatpush2.bf16.msra.mxu0 0
        %434 = vmatprep.subr.bf16.mxu0 0
        %435 = vmatpush2.bf16.msra.mxu0 0
        %436 = vmatprep.subr.bf16.mxu0 0
        %437 = vmatpush2.bf16.msra.mxu0 0
        %438 = vmatprep.subr.bf16.mxu0 0
        %439 = vmatpush2.bf16.msra.mxu0 0
        %440 = vmatprep.subr.bf16.mxu0 0
        %441 = vmatpush2.bf16.msra.mxu0 0
        %442 = vmatprep.subr.bf16.mxu0 0
        %443 = vmatpush2.bf16.msra.mxu0 0
        %444 = vmatprep.subr.bf16.mxu0 0
        %445 = vmatpush2.bf16.msra.mxu0 0
        %446 = vmatprep.mubr.bf16.mxu0 0
        %447 = vmatmul.mubr.bf16.gmra.mxu0 %v231
        %v448 = vpop.f32.mrf.mxu0
        %v449 = vadd.f32 %v274, %v448
        %v450 = vpop.f32.mrf.mxu0
        %v451 = vadd.f32 %v278, %v450
        %v452 = vpop.f32.mrf.mxu0
        %v453 = vpop.f32.mrf.mxu0
        %454 = vdwg.mxu0
        %455 = vmatprep.subr.bf16.mxu0 0
        %456 = vmatpush1.bf16.msra.mxu0 %v389
        %457 = vmatprep.subr.bf16.mxu0 0
        %458 = vmatpush1.bf16.msra.mxu0 %v386
        %459 = vmatprep.subr.bf16.mxu0 0
        %460 = vmatpush1.bf16.msra.mxu0 %v383
        %461 = vmatprep.subr.bf16.mxu0 0
        %462 = vmatpush1.bf16.msra.mxu0 %v380
        %463 = vmatprep.subr.bf16.mxu0 0
        %464 = vmatpush1.bf16.msra.mxu0 %v377
        %465 = vmatprep.subr.bf16.mxu0 0
        %466 = vmatpush1.bf16.msra.mxu0 %v374
        %467 = vmatprep.subr.bf16.mxu0 0
        %468 = vmatpush1.bf16.msra.mxu0 %v371
        %469 = vmatprep.subr.bf16.mxu0 0
        %470 = vmatpush1.bf16.msra.mxu0 %v368
        %471 = vmatprep.subr.bf16.mxu0 0
        %472 = vmatpush2.bf16.msra.mxu0 0
        %473 = vmatprep.subr.bf16.mxu0 0
        %474 = vmatpush2.bf16.msra.mxu0 0
        %475 = vmatprep.subr.bf16.mxu0 0
        %476 = vmatpush2.bf16.msra.mxu0 0
        %477 = vmatprep.subr.bf16.mxu0 0
        %478 = vmatpush2.bf16.msra.mxu0 0
        %479 = vmatprep.subr.bf16.mxu0 0
        %480 = vmatpush2.bf16.msra.mxu0 0
        %481 = vmatprep.subr.bf16.mxu0 0
        %482 = vmatpush2.bf16.msra.mxu0 0
        %483 = vmatprep.subr.bf16.mxu0 0
        %484 = vmatpush2.bf16.msra.mxu0 0
        %485 = vmatprep.subr.bf16.mxu0 0
        %486 = vmatpush2.bf16.msra.mxu0 0
        %487 = vmatprep.mubr.bf16.mxu0 0
        %488 = vmatmul.mubr.bf16.gmra.mxu0 %v231
        %v489 = vpop.f32.mrf.mxu0
        %v490 = vadd.f32 %v282, %v489
        %v491 = vpop.f32.mrf.mxu0
        %v492 = vpop.f32.mrf.mxu0
        %v493 = vpop.f32.mrf.mxu0
        %494 = vdwg.mxu0
        %v495 = vpack.c.bf16 %v449, %v449
        %v496 = vpack.c.bf16 %v451, %v451
        %v497 = vpack.c.bf16 %v490, %v490
        %498 = vmatprep.subr.bf16.mxu0 0
        %499 = vmatpush1.bf16.xpose.msra.mxu0 0
        %500 = vmatprep.subr.bf16.mxu0 0
        %501 = vmatpush1.bf16.xpose.msra.mxu0 0
        %502 = vmatprep.subr.bf16.mxu0 0
        %503 = vmatpush1.bf16.xpose.msra.mxu0 0
        %504 = vmatprep.subr.bf16.mxu0 0
        %505 = vmatpush1.bf16.xpose.msra.mxu0 0
        %506 = vmatprep.subr.bf16.mxu0 0
        %507 = vmatpush1.bf16.xpose.msra.mxu0 0
        %508 = vmatprep.subr.bf16.mxu0 0
        %509 = vmatpush1.bf16.xpose.msra.mxu0 0
        %510 = vmatprep.subr.bf16.mxu0 0
        %511 = vmatpush1.bf16.xpose.msra.mxu0 0
        %512 = vmatprep.subr.bf16.mxu0 0
        %513 = vmatpush1.bf16.xpose.msra.mxu0 %v496
        %514 = vmatprep.subr.bf16.mxu0 0
        %515 = vmatpush2.bf16.xpose.msra.mxu0 0
        %516 = vmatprep.subr.bf16.mxu0 0
        %517 = vmatpush2.bf16.xpose.msra.mxu0 0
        %518 = vmatprep.subr.bf16.mxu0 0
        %519 = vmatpush2.bf16.xpose.msra.mxu0 0
        %520 = vmatprep.subr.bf16.mxu0 0
        %521 = vmatpush2.bf16.xpose.msra.mxu0 0
        %522 = vmatprep.subr.bf16.mxu0 0
        %523 = vmatpush2.bf16.xpose.msra.mxu0 0
        %524 = vmatprep.subr.bf16.mxu0 0
        %525 = vmatpush2.bf16.xpose.msra.mxu0 0
        %526 = vmatprep.subr.bf16.mxu0 0
        %527 = vmatpush2.bf16.xpose.msra.mxu0 0
        %528 = vmatprep.subr.bf16.mxu0 0
        %529 = vmatpush2.bf16.xpose.msra.mxu0 0
        %530 = vmatprep.mubr.bf16.mxu0 0
        %531 = vmatmul.mubr.bf16.gmra.mxu0 %v495
        %v532 = vpop.f32.mrf.mxu0
        %v533 = vadd.f32 0.0, %v532
        %v534 = vpop.f32.mrf.mxu0
        %v535 = vpop.f32.mrf.mxu0
        %v536 = vpop.f32.mrf.mxu0
        %537 = vdwg.mxu0
        %vm538 = vcmask 64512
        %v539 = vsel %vm538, %v533, -inf
        %540 = vmax.xlane.f32.xlu0 %v539
        %v541 = vpop.xlane.xlu0 %540
        %v542 = vsub.f32 %v533, %v541
        %v543 = vmul.f32 %v542, 1.442695
        %v544 = vpow.pop %v543
        %v545 = vsel %vm538, %v544, 0.0
        %546 = vadd.xlane.f32.xlu0 %v545
        %v547 = vpop.xlane.xlu0 %546
        %v548 = vrcp.pop %v547
        %v549 = vmul.f32 %v544, %v548
        %v550 = vpack.c.bf16 %v549, %v549
        %v552 = vsel %vm538, %v550, 0
        %vm554 = vcmask 1043456
        %v556 = vsel %vm554, %v497, 0
        %558 = vmatprep.subr.bf16.mxu0 0
        %559 = vmatpush1.bf16.msra.mxu0 0
        %560 = vmatprep.subr.bf16.mxu0 0
        %561 = vmatpush1.bf16.msra.mxu0 0
        %562 = vmatprep.subr.bf16.mxu0 0
        %563 = vmatpush1.bf16.msra.mxu0 0
        %564 = vmatprep.subr.bf16.mxu0 0
        %565 = vmatpush1.bf16.msra.mxu0 0
        %566 = vmatprep.subr.bf16.mxu0 0
        %567 = vmatpush1.bf16.msra.mxu0 0
        %568 = vmatprep.subr.bf16.mxu0 0
        %569 = vmatpush1.bf16.msra.mxu0 0
        %570 = vmatprep.subr.bf16.mxu0 0
        %571 = vmatpush1.bf16.msra.mxu0 0
        %572 = vmatprep.subr.bf16.mxu0 0
        %573 = vmatpush1.bf16.msra.mxu0 %v556
        %574 = vmatprep.subr.bf16.mxu0 0
        %575 = vmatpush2.bf16.msra.mxu0 0
        %576 = vmatprep.subr.bf16.mxu0 0
        %577 = vmatpush2.bf16.msra.mxu0 0
        %578 = vmatprep.subr.bf16.mxu0 0
        %579 = vmatpush2.bf16.msra.mxu0 0
        %580 = vmatprep.subr.bf16.mxu0 0
        %581 = vmatpush2.bf16.msra.mxu0 0
        %582 = vmatprep.subr.bf16.mxu0 0
        %583 = vmatpush2.bf16.msra.mxu0 0
        %584 = vmatprep.subr.bf16.mxu0 0
        %585 = vmatpush2.bf16.msra.mxu0 0
        %586 = vmatprep.subr.bf16.mxu0 0
        %587 = vmatpush2.bf16.msra.mxu0 0
        %588 = vmatprep.subr.bf16.mxu0 0
        %589 = vmatpush2.bf16.msra.mxu0 0
        %590 = vmatprep.mubr.bf16.mxu0 0
        %591 = vmatmul.mubr.bf16.gmra.mxu0 %v552
        %v592 = vpop.f32.mrf.mxu0
        %v593 = vadd.f32 0.0, %v592
        %v594 = vpop.f32.mrf.mxu0
        %v595 = vpop.f32.mrf.mxu0
        %v596 = vpop.f32.mrf.mxu0
        %597 = vdwg.mxu0
        %598 = vst [vmem:[%s228] sm:$0xff] %v593
        %s599 = sand.u32 %s111, 1
        %s600 = scalar_lea.sflag [#allocation4], %s599
        %s601 = sand.u32 %s111, 1
        %s602 = smul.addr %s601, 8
        %s603 = scalar_lea.vmem [#allocation8], %s602
        // Predicated region
        $region45: #{tpu_custom_call.1} parent=31 // pred_check
          %p604 = pneg %p121
        $region46: #{tpu_custom_call.1} parent=31 // pred_check_branch
          %606 = sbr.rel (%p604) target = $region48
        $region47: #{tpu_custom_call.1} parent=31 // pred_region
          %s608 = ssub.s32 128, 128
          %609 = vsyncadd %s600, %s608
          %s610 = smul.addr %s25, 2
          %s611 = sadd.s32 %s26, %s610
          %s612 = smul.addr %s611, 128
          %s613 = scalar_lea.hbm %s3, %s612
          %s615 = sshll.u32 %s603, 4
          %s616 = int_to_ptr.vmem [resolvable:$true] %s615
          %618 = dma.vmem_to_hbm [thread:$0]  %s616, 128, %s613, %s600
        $region48: #{tpu_custom_call.1} parent=31 // pred_fallthru
          _
      $region32: #{tpu_custom_call.1} parent=5 // pred_fallthru
        _
      %p619 = scmp.le.s32.totalorder 2, %s16
      // Predicated region
      $region49: #{tpu_custom_call.1} parent=5 // pred_check
        %p620 = pneg %p619
      $region50: #{tpu_custom_call.1} parent=5 // pred_check_branch
        %622 = sbr.rel (%p620) target = $region52
      $region51: #{tpu_custom_call.1} parent=5 // pred_region
        %s623 = ssub.s32 %s16, 2
        // Predicated region
        $region53: #{tpu_custom_call.1} parent=51 // pred_check
          %p624 = pneg %p127
        $region54: #{tpu_custom_call.1} parent=51 // pred_check_branch
          %626 = sbr.rel (%p624) target = $region56
        $region55: #{tpu_custom_call.1} parent=51 // pred_region
          %s627 = sand.u32 %s112, 1
          %s628 = scalar_lea.sflag [#allocation4], %s627
          %s629 = sand.u32 %s112, 1
          %s630 = smul.addr %s629, 8
          %s631 = scalar_lea.vmem [#allocation8], %s630
          %632 = dma.done %s628, 128
        $region56: #{tpu_custom_call.1} parent=51 // pred_fallthru
          _
      $region52: #{tpu_custom_call.1} parent=5 // pred_fallthru
        _
    $region6: #{tpu_custom_call.1} parent=1 // loop_footer
      %s20 = sadd.s32 1, %s16
    $region7: #{tpu_custom_call.1} parent=1 // loop_footer_branch
      %15 = sbr.rel target = $region3
    $region8: #{tpu_custom_call.1} parent=1 // loop_exit
      _
    %633 = vsyncpa [#allocation3], 1
    %s634 = scalar_lea.sflag [#allocation3], 1
    %635 = vsyncpa %s634, 1
    %636 = vsyncpa [#allocation6], 1
    %637 = vsyncpa [#allocation4], 1
    %s638 = scalar_lea.sflag [#allocation4], 1
    %639 = vsyncpa %s638, 1

</llo_original>
